<compile_context>
chip_gen: v7x
topology: tpu7x:2x2x1
jax: 0.10.0
libtpu: 0.0.40
codegen_flags: <defaults>
</compile_context>

<pallas_src>
import jax
import jax.numpy as jnp
from jax import lax
from jax.experimental import pallas as pl
from jax.experimental.pallas import tpu as pltpu

# ---------------- mini-BERT config (small shapes) ----------------
VOCAB = 128
BATCH = 2
SEQ = 8                        # == sublane tile, so per-sequence blocks are tile-aligned
HIDDEN = 32                    # plays the role of embedding_dim=768
N_HEADS = 4
HEAD_DIM = HIDDEN // N_HEADS
FFN = 64
N_LAYERS = 2
PROJ = 16                      # plays the role of projection_dim=256
PROJ_PAD = 128                 # lane-dense output width (sliced back to PROJ)
VEC_LANES = 128                # lane width of the packed bias/gamma/beta tensors
LN_EPS = 1e-12                 # BERT LayerNorm eps

_NT_DIMS = (((1,), (1,)), ((), ()))   # contract last dims: q @ k^T without a transpose


def _layernorm(x, gamma, beta):
    mu = jnp.mean(x, axis=-1, keepdims=True)
    var = jnp.mean((x - mu) ** 2, axis=-1, keepdims=True)
    return (x - mu) * lax.rsqrt(var + LN_EPS) * gamma + beta


def _bf16(x):
    return x.astype(jnp.bfloat16)


# ---------------- fused Pallas kernel (one sequence per program) ----------------
def fused_encoder_kernel(x_ref, mask_ref, misc_ref, lvec_ref,
                         wqkv_ref, wo_ref, w1_ref, w2_ref, pw_ref, out_ref):
    misc = misc_ref[...]                              # (8, 128) f32
    emb_g = misc[0:1, :HIDDEN]
    emb_b = misc[1:2, :HIDDEN]
    proj_b = misc[2:3, :]                             # (1, PROJ_PAD)

    # Embedding LayerNorm (prologue).
    x = _layernorm(x_ref[...], emb_g, emb_b)          # (SEQ, H) f32

    # Key-padding additive bias built in-kernel from the (1, S) mask row;
    # reused by every layer / head.
    bias = jnp.where(mask_ref[...] > 0.0, 0.0, -1e9).astype(jnp.float32)   # (1, SEQ)

    def layer(l, x):
        v = lvec_ref[l]                               # (8, 128) f32: packed per-layer vectors
        bqkv = v[0:1, :3 * HIDDEN]
        bo = v[1:2, :HIDDEN]
        g1 = v[2:3, :HIDDEN]
        be1 = v[3:4, :HIDDEN]
        b1 = v[4:5, :FFN]
        b2 = v[5:6, :HIDDEN]
        g2 = v[6:7, :HIDDEN]
        be2 = v[7:8, :HIDDEN]

        xb = _bf16(x)
        # Single fused QKV matmul (Q columns / bias pre-scaled by 1/sqrt(HD)).
        qkv = jnp.dot(xb, wqkv_ref[l], preferred_element_type=jnp.float32) + bqkv
        qkv = _bf16(qkv)                              # one cast; per-head slices below

        ctx_heads = []
        for h in range(N_HEADS):                      # static unroll; lane slices only
            qh = qkv[:, h * HEAD_DIM:(h + 1) * HEAD_DIM]
            kh = qkv[:, HIDDEN + h * HEAD_DIM:HIDDEN + (h + 1) * HEAD_DIM]
            vh = qkv[:, 2 * HIDDEN + h * HEAD_DIM:2 * HIDDEN + (h + 1) * HEAD_DIM]

            s = lax.dot_general(qh, kh, _NT_DIMS,
                                preferred_element_type=jnp.float32) + bias   # (S, S)
            m = jnp.max(s, axis=-1, keepdims=True)
            e = jnp.exp(s - m)
            p = e * pl.reciprocal(jnp.sum(e, axis=-1, keepdims=True), approx=True)
            ctx_heads.append(jnp.dot(_bf16(p), vh, preferred_element_type=jnp.float32))

        # Lane-concat heads, one output projection against the un-split Wo.
        ctx = _bf16(jnp.concatenate(ctx_heads, axis=-1))                     # (S, H)
        attn = jnp.dot(ctx, wo_ref[l], preferred_element_type=jnp.float32) + bo

        x1 = _layernorm(x + attn, g1, be1)

        h1 = jnp.dot(_bf16(x1), w1_ref[l], preferred_element_type=jnp.float32) + b1
        # TODO(synk): HF BERT uses exact (erf) GELU; tanh approximation used here.
        h1 = jax.nn.gelu(h1, approximate=True)
        h2 = jnp.dot(_bf16(h1), w2_ref[l], preferred_element_type=jnp.float32) + b2
        return _layernorm(x1 + h2, g2, be2)

    x = lax.fori_loop(0, N_LAYERS, layer, x)

    # Project the whole (SEQ, H) slab (row 0 is CLS) -> unmasked (8, 128) store;
    # wrapper keeps row 0 and the first PROJ lanes.
    out_ref[...] = jnp.dot(_bf16(x), pw_ref[...],
                           preferred_element_type=jnp.float32) + proj_b


# ---------------- deterministic synthetic parameters ----------------
def init_params(key):
    def normal(k, shape, std=0.02):
        return (std * jax.random.normal(k, shape)).astype(jnp.float32)

    keys = iter(jax.random.split(key, 64))
    params = {
        "tok_emb": normal(next(keys), (VOCAB, HIDDEN)),
        "pos_emb": normal(next(keys), (SEQ, HIDDEN)),
        "emb_gamma": jnp.ones((1, HIDDEN), jnp.float32),
        "emb_beta": jnp.zeros((1, HIDDEN), jnp.float32),
        "proj_w": normal(next(keys), (HIDDEN, PROJ)),
        "proj_b": jnp.zeros((1, PROJ), jnp.float32),
        "layers": [],
    }
    for _ in range(N_LAYERS):
        params["layers"].append({
            "wq": normal(next(keys), (HIDDEN, HIDDEN)),
            "bq": jnp.zeros((1, HIDDEN), jnp.float32),
            "wk": normal(next(keys), (HIDDEN, HIDDEN)),
            "bk": jnp.zeros((1, HIDDEN), jnp.float32),
            "wv": normal(next(keys), (HIDDEN, HIDDEN)),
            "bv": jnp.zeros((1, HIDDEN), jnp.float32),
            "wo": normal(next(keys), (HIDDEN, HIDDEN)),
            "bo": jnp.zeros((1, HIDDEN), jnp.float32),
            "g1": jnp.ones((1, HIDDEN), jnp.float32),
            "be1": jnp.zeros((1, HIDDEN), jnp.float32),
            "w1": normal(next(keys), (HIDDEN, FFN)),
            "b1": jnp.zeros((1, FFN), jnp.float32),
            "w2": normal(next(keys), (FFN, HIDDEN)),
            "b2": jnp.zeros((1, HIDDEN), jnp.float32),
            "g2": jnp.ones((1, HIDDEN), jnp.float32),
            "be2": jnp.zeros((1, HIDDEN), jnp.float32),
        })
    return params


def pack_params(params):
    """Repack canonical per-layer BERT weights into the fused-kernel layout:
    fused bf16 QKV weight (Q pre-scaled by 1/sqrt(head_dim)), stacked bf16
    wo/w1/w2, all per-layer vectors packed into one (L, 8, 128) f32 tensor,
    embedding-LN + projection bias packed into one (8, 128) tensor, and the
    projection weight lane-padded to 128.  Done once, outside jit."""
    L, H, HD = N_LAYERS, HIDDEN, HEAD_DIM
    scale = 1.0 / (HD ** 0.5)

    def stack(name):
        return jnp.stack([lp[name] for lp in params["layers"]])        # (L, ...)

    wqkv = jnp.concatenate([stack("wq") * scale, stack("wk"), stack("wv")], axis=-1)
    bqkv = jnp.concatenate([stack("bq") * scale, stack("bk"), stack("bv")], axis=-1)

    def pad_lanes(a):                                                   # (L, 1, w) -> (L, 1, 128)
        return jnp.pad(a, ((0, 0), (0, 0), (0, VEC_LANES - a.shape[-1])))

    layer_vecs = jnp.concatenate([
        pad_lanes(bqkv),
        pad_lanes(stack("bo")),
        pad_lanes(stack("g1")),
        pad_lanes(stack("be1")),
        pad_lanes(stack("b1")),
        pad_lanes(stack("b2")),
        pad_lanes(stack("g2")),
        pad_lanes(stack("be2")),
    ], axis=1)                                                          # (L, 8, 128)

    misc = jnp.zeros((8, VEC_LANES), jnp.float32)
    misc = misc.at[0, :H].set(params["emb_gamma"][0])
    misc = misc.at[1, :H].set(params["emb_beta"][0])
    misc = misc.at[2, :PROJ_PAD].set(jnp.pad(params["proj_b"][0], (0, PROJ_PAD - PROJ)))

    return {
        "tok_emb": params["tok_emb"],
        "pos_emb": params["pos_emb"],
        "misc": misc,
        "layer_vecs": layer_vecs,
        "wqkv": _bf16(wqkv),                                            # (L, H, 3H)
        "wo": _bf16(stack("wo")),                                       # (L, H, H)
        "w1": _bf16(stack("w1")),                                       # (L, H, FFN)
        "w2": _bf16(stack("w2")),                                       # (L, FFN, H)
        "proj_w": _bf16(jnp.pad(params["proj_w"], ((0, 0), (0, PROJ_PAD - PROJ)))),
    }


# ---------------- forward pass (mirrors the PyTorch module) ----------------
@jax.jit
def sentence_transformer_with_projection(kp, input_ids, attention_mask):
    # TODO(synk): the HF tokenizer (string -> ids) has no Pallas equivalent;
    # inputs are pre-tokenized ids + attention mask.
    B, S = input_ids.shape
    # Embedding lookup (data-dependent gather) stays in plain JAX.
    x = kp["tok_emb"][input_ids] + kp["pos_emb"][None, :S, :]
    x = x.reshape(B * S, HIDDEN).astype(jnp.float32)
    mask = attention_mask.astype(jnp.float32).reshape(B, 1, S)

    out = pl.pallas_call(
        fused_encoder_kernel,
        grid=(B,),
        in_specs=[
            pl.BlockSpec((SEQ, HIDDEN), lambda b: (b, 0)),                       # x rows of seq b
            pl.BlockSpec((None, 1, SEQ), lambda b: (b, 0, 0)),                   # mask row of seq b
            pl.BlockSpec((8, VEC_LANES), lambda b: (0, 0)),                      # misc vectors
            pl.BlockSpec((N_LAYERS, 8, VEC_LANES), lambda b: (0, 0, 0)),         # per-layer vectors
            pl.BlockSpec((N_LAYERS, HIDDEN, 3 * HIDDEN), lambda b: (0, 0, 0)),   # fused QKV
            pl.BlockSpec((N_LAYERS, HIDDEN, HIDDEN), lambda b: (0, 0, 0)),       # wo
            pl.BlockSpec((N_LAYERS, HIDDEN, FFN), lambda b: (0, 0, 0)),          # w1
            pl.BlockSpec((N_LAYERS, FFN, HIDDEN), lambda b: (0, 0, 0)),          # w2
            pl.BlockSpec((HIDDEN, PROJ_PAD), lambda b: (0, 0)),                  # proj weight
        ],
        out_specs=pl.BlockSpec((None, SEQ, PROJ_PAD), lambda b: (b, 0, 0)),
        out_shape=jax.ShapeDtypeStruct((B, SEQ, PROJ_PAD), jnp.float32),
        compiler_params=pltpu.CompilerParams(
            dimension_semantics=("parallel",),      # one sequence per program; both TCs on v7x
            vmem_limit_bytes=32 * 1024 * 1024),
    )(x, mask, kp["misc"], kp["layer_vecs"],
      kp["wqkv"], kp["wo"], kp["w1"], kp["w2"], kp["proj_w"])

    # Row 0 of each sequence's projected slab is the projected CLS embedding.
    return out[:, 0, :PROJ]


if __name__ == "__main__":
    key = jax.random.PRNGKey(0)
    pkey, ikey = jax.random.split(key)
    params = init_params(pkey)
    kernel_params = pack_params(params)

    # Synthetic "tokenized" batch: [CLS]-like id at position 0, no padding.
    input_ids = jax.random.randint(ikey, (BATCH, SEQ), minval=5, maxval=VOCAB,
                                   dtype=jnp.int32)
    input_ids = input_ids.at[:, 0].set(1)           # CLS token id
    attention_mask = jnp.ones((BATCH, SEQ), jnp.int32)

    out = sentence_transformer_with_projection(kernel_params, input_ids, attention_mask)
    out = jax.block_until_ready(out)
    assert out.shape == (BATCH, PROJ) and out.dtype == jnp.float32
    assert bool(jnp.all(jnp.isfinite(out)))
    print("KERNEL_OK")
</pallas_src>

<mosaic_0001>
module attributes {stable_mosaic.version = 11 : i64} {
  func.func @fused_encoder_kernel(%arg0: i32, %arg1: memref<8x32xf32, #tpu.memory_space<vmem>>, %arg2: memref<1x1x8xf32, #tpu.memory_space<vmem>>, %arg3: memref<8x128xf32, #tpu.memory_space<vmem>>, %arg4: memref<2x8x128xf32, #tpu.memory_space<vmem>>, %arg5: memref<2x32x96xbf16, #tpu.memory_space<vmem>>, %arg6: memref<2x32x32xbf16, #tpu.memory_space<vmem>>, %arg7: memref<2x32x64xbf16, #tpu.memory_space<vmem>>, %arg8: memref<2x64x32xbf16, #tpu.memory_space<vmem>>, %arg9: memref<32x128xbf16, #tpu.memory_space<vmem>>, %arg10: memref<1x8x128xf32, #tpu.memory_space<vmem>>) attributes {dimension_semantics = [#tpu.dimension_semantics<parallel>], iteration_bounds = array<i64: 2>, scalar_prefetch = 0 : i64, scratch_operands = 0 : i64, tpu.core_type = #tpu.core_type<tc>, window_params = [{transform_indices = @transform_0, window_bounds = array<i64: 8, 32>}, {transform_indices = @transform_1, window_bounds = array<i64: 1, 1, 8>}, {pipeline_mode = #tpu.pipeline_mode<synchronous>, transform_indices = @transform_2, window_bounds = array<i64: 8, 128>}, {pipeline_mode = #tpu.pipeline_mode<synchronous>, transform_indices = @transform_3, window_bounds = array<i64: 2, 8, 128>}, {pipeline_mode = #tpu.pipeline_mode<synchronous>, transform_indices = @transform_4, window_bounds = array<i64: 2, 32, 96>}, {pipeline_mode = #tpu.pipeline_mode<synchronous>, transform_indices = @transform_5, window_bounds = array<i64: 2, 32, 32>}, {pipeline_mode = #tpu.pipeline_mode<synchronous>, transform_indices = @transform_6, window_bounds = array<i64: 2, 32, 64>}, {pipeline_mode = #tpu.pipeline_mode<synchronous>, transform_indices = @transform_7, window_bounds = array<i64: 2, 64, 32>}, {pipeline_mode = #tpu.pipeline_mode<synchronous>, transform_indices = @transform_8, window_bounds = array<i64: 32, 128>}, {transform_indices = @transform_9, window_bounds = array<i64: 1, 8, 128>}]} {
    %c0 = arith.constant 0 : index
    %c0_0 = arith.constant 0 : index
    %0 = vector.load %arg3[%c0, %c0_0] : memref<8x128xf32, #tpu.memory_space<vmem>>, vector<8x128xf32>
    %1 = vector.extract_strided_slice %0 {offsets = [0, 0], sizes = [1, 32], strides = [1, 1]} : vector<8x128xf32> to vector<1x32xf32>
    %2 = vector.extract_strided_slice %0 {offsets = [1, 0], sizes = [1, 32], strides = [1, 1]} : vector<8x128xf32> to vector<1x32xf32>
    %3 = vector.extract_strided_slice %0 {offsets = [2, 0], sizes = [1, 128], strides = [1, 1]} : vector<8x128xf32> to vector<1x128xf32>
    %c0_1 = arith.constant 0 : index
    %c0_2 = arith.constant 0 : index
    %4 = vector.load %arg1[%c0_1, %c0_2] : memref<8x32xf32, #tpu.memory_space<vmem>>, vector<8x32xf32>
    %cst = arith.constant dense<0.000000e+00> : vector<8xf32>
    %5 = vector.multi_reduction <add>, %4, %cst [1] : vector<8x32xf32> to vector<8xf32>
    %6 = vector.shape_cast %5 : vector<8xf32> to vector<8x1xf32>
    %cst_3 = arith.constant 3.200000e+01 : f32
    %7 = vector.broadcast %cst_3 : f32 to vector<8x1xf32>
    %8 = arith.divf %6, %7 : vector<8x1xf32>
    %9 = vector.broadcast %8 : vector<8x1xf32> to vector<8x32xf32>
    %10 = arith.subf %4, %9 : vector<8x32xf32>
    %11 = arith.mulf %10, %10 : vector<8x32xf32>
    %cst_4 = arith.constant dense<0.000000e+00> : vector<8xf32>
    %12 = vector.multi_reduction <add>, %11, %cst_4 [1] : vector<8x32xf32> to vector<8xf32>
    %13 = vector.shape_cast %12 : vector<8xf32> to vector<8x1xf32>
    %cst_5 = arith.constant 3.200000e+01 : f32
    %14 = vector.broadcast %cst_5 : f32 to vector<8x1xf32>
    %15 = arith.divf %13, %14 : vector<8x1xf32>
    %16 = vector.broadcast %8 : vector<8x1xf32> to vector<8x32xf32>
    %17 = arith.subf %4, %16 : vector<8x32xf32>
    %cst_6 = arith.constant 9.99999996E-13 : f32
    %18 = vector.broadcast %cst_6 : f32 to vector<8x1xf32>
    %19 = arith.addf %15, %18 : vector<8x1xf32>
    %20 = math.rsqrt %19 : vector<8x1xf32>
    %21 = vector.broadcast %20 : vector<8x1xf32> to vector<8x32xf32>
    %22 = arith.mulf %17, %21 : vector<8x32xf32>
    %23 = vector.broadcast %1 : vector<1x32xf32> to vector<8x32xf32>
    %24 = arith.mulf %22, %23 : vector<8x32xf32>
    %25 = vector.broadcast %2 : vector<1x32xf32> to vector<8x32xf32>
    %26 = arith.addf %24, %25 : vector<8x32xf32>
    %c0_7 = arith.constant 0 : index
    %c0_8 = arith.constant 0 : index
    %c0_9 = arith.constant 0 : index
    %27 = vector.load %arg2[%c0_7, %c0_8, %c0_9] : memref<1x1x8xf32, #tpu.memory_space<vmem>>, vector<1x1x8xf32>
    %28 = vector.shape_cast %27 : vector<1x1x8xf32> to vector<1x8xf32>
    %cst_10 = arith.constant 0.000000e+00 : f32
    %29 = vector.broadcast %cst_10 : f32 to vector<1x8xf32>
    %30 = arith.cmpf ogt, %28, %29 : vector<1x8xf32>
    %cst_11 = arith.constant 0.000000e+00 : f32
    %cst_12 = arith.constant -1.000000e+09 : f32
    %31 = vector.broadcast %cst_11 : f32 to vector<1x8xf32>
    %32 = vector.broadcast %cst_12 : f32 to vector<1x8xf32>
    %33 = arith.select %30, %31, %32 : vector<1x8xi1>, vector<1x8xf32>
    %c0_i32 = arith.constant 0 : i32
    %c2_i32 = arith.constant 2 : i32
    %34 = arith.addi %c0_i32, %c2_i32 : i32
    %c1_i32 = arith.constant 1 : i32
    %35 = scf.for %arg11 = %c0_i32 to %34 step %c1_i32 iter_args(%arg12 = %26) -> (vector<8x32xf32>)  : i32 {
      %44 = arith.index_cast %arg11 : i32 to index
      %c0_20 = arith.constant 0 : index
      %c0_21 = arith.constant 0 : index
      %45 = vector.load %arg4[%44, %c0_20, %c0_21] : memref<2x8x128xf32, #tpu.memory_space<vmem>>, vector<1x8x128xf32>
      %46 = vector.shape_cast %45 : vector<1x8x128xf32> to vector<8x128xf32>
      %47 = vector.extract_strided_slice %46 {offsets = [0, 0], sizes = [1, 96], strides = [1, 1]} : vector<8x128xf32> to vector<1x96xf32>
      %48 = vector.extract_strided_slice %46 {offsets = [1, 0], sizes = [1, 32], strides = [1, 1]} : vector<8x128xf32> to vector<1x32xf32>
      %49 = vector.extract_strided_slice %46 {offsets = [2, 0], sizes = [1, 32], strides = [1, 1]} : vector<8x128xf32> to vector<1x32xf32>
      %50 = vector.extract_strided_slice %46 {offsets = [3, 0], sizes = [1, 32], strides = [1, 1]} : vector<8x128xf32> to vector<1x32xf32>
      %51 = vector.extract_strided_slice %46 {offsets = [4, 0], sizes = [1, 64], strides = [1, 1]} : vector<8x128xf32> to vector<1x64xf32>
      %52 = vector.extract_strided_slice %46 {offsets = [5, 0], sizes = [1, 32], strides = [1, 1]} : vector<8x128xf32> to vector<1x32xf32>
      %53 = vector.extract_strided_slice %46 {offsets = [6, 0], sizes = [1, 32], strides = [1, 1]} : vector<8x128xf32> to vector<1x32xf32>
      %54 = vector.extract_strided_slice %46 {offsets = [7, 0], sizes = [1, 32], strides = [1, 1]} : vector<8x128xf32> to vector<1x32xf32>
      %55 = arith.truncf %arg12 : vector<8x32xf32> to vector<8x32xbf16>
      %56 = arith.index_cast %arg11 : i32 to index
      %c0_22 = arith.constant 0 : index
      %c0_23 = arith.constant 0 : index
      %57 = vector.load %arg5[%56, %c0_22, %c0_23] : memref<2x32x96xbf16, #tpu.memory_space<vmem>>, vector<1x32x96xbf16>
      %58 = vector.shape_cast %57 : vector<1x32x96xbf16> to vector<32x96xbf16>
      %cst_24 = arith.constant dense<0.000000e+00> : vector<8x96xf32>
      %59 = tpu.matmul %55, %58, %cst_24 {dimension_numbers = #tpu.dot_dimension_numbers<[1], [0], [0], [1], [0, 0, 1, 1], [], []>} : vector<8x32xbf16>, vector<32x96xbf16>, vector<8x96xf32> -> vector<8x96xf32>
      %60 = vector.broadcast %47 : vector<1x96xf32> to vector<8x96xf32>
      %61 = arith.addf %59, %60 : vector<8x96xf32>
      %62 = arith.truncf %61 : vector<8x96xf32> to vector<8x96xbf16>
      %63 = vector.extract_strided_slice %62 {offsets = [0, 0], sizes = [8, 8], strides = [1, 1]} : vector<8x96xbf16> to vector<8x8xbf16>
      %64 = vector.extract_strided_slice %62 {offsets = [0, 32], sizes = [8, 8], strides = [1, 1]} : vector<8x96xbf16> to vector<8x8xbf16>
      %65 = vector.extract_strided_slice %62 {offsets = [0, 64], sizes = [8, 8], strides = [1, 1]} : vector<8x96xbf16> to vector<8x8xbf16>
      %cst_25 = arith.constant dense<0.000000e+00> : vector<8x8xf32>
      %66 = tpu.matmul %63, %64, %cst_25 {dimension_numbers = #tpu.dot_dimension_numbers<[1], [1], [0], [0], [0, 0, 1, 0], [], []>} : vector<8x8xbf16>, vector<8x8xbf16>, vector<8x8xf32> -> vector<8x8xf32>
      %67 = vector.broadcast %33 : vector<1x8xf32> to vector<8x8xf32>
      %68 = arith.addf %66, %67 : vector<8x8xf32>
      %cst_26 = arith.constant dense<0xFF800000> : vector<8xf32>
      %69 = vector.multi_reduction <maximumf>, %68, %cst_26 [1] : vector<8x8xf32> to vector<8xf32>
      %70 = vector.shape_cast %69 : vector<8xf32> to vector<8x1xf32>
      %71 = vector.broadcast %70 : vector<8x1xf32> to vector<8x8xf32>
      %72 = arith.subf %68, %71 : vector<8x8xf32>
      %73 = math.exp %72 : vector<8x8xf32>
      %cst_27 = arith.constant dense<0.000000e+00> : vector<8xf32>
      %74 = vector.multi_reduction <add>, %73, %cst_27 [1] : vector<8x8xf32> to vector<8xf32>
      %75 = vector.shape_cast %74 : vector<8xf32> to vector<8x1xf32>
      %76 = tpu.reciprocal %75 {approx = true} : vector<8x1xf32> -> vector<8x1xf32>
      %77 = vector.broadcast %76 : vector<8x1xf32> to vector<8x8xf32>
      %78 = arith.mulf %73, %77 : vector<8x8xf32>
      %79 = arith.truncf %78 : vector<8x8xf32> to vector<8x8xbf16>
      %cst_28 = arith.constant dense<0.000000e+00> : vector<8x8xf32>
      %80 = tpu.matmul %79, %65, %cst_28 {dimension_numbers = #tpu.dot_dimension_numbers<[1], [0], [0], [1], [0, 0, 1, 1], [], []>} : vector<8x8xbf16>, vector<8x8xbf16>, vector<8x8xf32> -> vector<8x8xf32>
      %81 = vector.extract_strided_slice %62 {offsets = [0, 8], sizes = [8, 8], strides = [1, 1]} : vector<8x96xbf16> to vector<8x8xbf16>
      %82 = vector.extract_strided_slice %62 {offsets = [0, 40], sizes = [8, 8], strides = [1, 1]} : vector<8x96xbf16> to vector<8x8xbf16>
      %83 = vector.extract_strided_slice %62 {offsets = [0, 72], sizes = [8, 8], strides = [1, 1]} : vector<8x96xbf16> to vector<8x8xbf16>
      %cst_29 = arith.constant dense<0.000000e+00> : vector<8x8xf32>
      %84 = tpu.matmul %81, %82, %cst_29 {dimension_numbers = #tpu.dot_dimension_numbers<[1], [1], [0], [0], [0, 0, 1, 0], [], []>} : vector<8x8xbf16>, vector<8x8xbf16>, vector<8x8xf32> -> vector<8x8xf32>
      %85 = vector.broadcast %33 : vector<1x8xf32> to vector<8x8xf32>
      %86 = arith.addf %84, %85 : vector<8x8xf32>
      %cst_30 = arith.constant dense<0xFF800000> : vector<8xf32>
      %87 = vector.multi_reduction <maximumf>, %86, %cst_30 [1] : vector<8x8xf32> to vector<8xf32>
      %88 = vector.shape_cast %87 : vector<8xf32> to vector<8x1xf32>
      %89 = vector.broadcast %88 : vector<8x1xf32> to vector<8x8xf32>
      %90 = arith.subf %86, %89 : vector<8x8xf32>
      %91 = math.exp %90 : vector<8x8xf32>
      %cst_31 = arith.constant dense<0.000000e+00> : vector<8xf32>
      %92 = vector.multi_reduction <add>, %91, %cst_31 [1] : vector<8x8xf32> to vector<8xf32>
      %93 = vector.shape_cast %92 : vector<8xf32> to vector<8x1xf32>
      %94 = tpu.reciprocal %93 {approx = true} : vector<8x1xf32> -> vector<8x1xf32>
      %95 = vector.broadcast %94 : vector<8x1xf32> to vector<8x8xf32>
      %96 = arith.mulf %91, %95 : vector<8x8xf32>
      %97 = arith.truncf %96 : vector<8x8xf32> to vector<8x8xbf16>
      %cst_32 = arith.constant dense<0.000000e+00> : vector<8x8xf32>
      %98 = tpu.matmul %97, %83, %cst_32 {dimension_numbers = #tpu.dot_dimension_numbers<[1], [0], [0], [1], [0, 0, 1, 1], [], []>} : vector<8x8xbf16>, vector<8x8xbf16>, vector<8x8xf32> -> vector<8x8xf32>
      %99 = vector.extract_strided_slice %62 {offsets = [0, 16], sizes = [8, 8], strides = [1, 1]} : vector<8x96xbf16> to vector<8x8xbf16>
      %100 = vector.extract_strided_slice %62 {offsets = [0, 48], sizes = [8, 8], strides = [1, 1]} : vector<8x96xbf16> to vector<8x8xbf16>
      %101 = vector.extract_strided_slice %62 {offsets = [0, 80], sizes = [8, 8], strides = [1, 1]} : vector<8x96xbf16> to vector<8x8xbf16>
      %cst_33 = arith.constant dense<0.000000e+00> : vector<8x8xf32>
      %102 = tpu.matmul %99, %100, %cst_33 {dimension_numbers = #tpu.dot_dimension_numbers<[1], [1], [0], [0], [0, 0, 1, 0], [], []>} : vector<8x8xbf16>, vector<8x8xbf16>, vector<8x8xf32> -> vector<8x8xf32>
      %103 = vector.broadcast %33 : vector<1x8xf32> to vector<8x8xf32>
      %104 = arith.addf %102, %103 : vector<8x8xf32>
      %cst_34 = arith.constant dense<0xFF800000> : vector<8xf32>
      %105 = vector.multi_reduction <maximumf>, %104, %cst_34 [1] : vector<8x8xf32> to vector<8xf32>
      %106 = vector.shape_cast %105 : vector<8xf32> to vector<8x1xf32>
      %107 = vector.broadcast %106 : vector<8x1xf32> to vector<8x8xf32>
      %108 = arith.subf %104, %107 : vector<8x8xf32>
      %109 = math.exp %108 : vector<8x8xf32>
      %cst_35 = arith.constant dense<0.000000e+00> : vector<8xf32>
      %110 = vector.multi_reduction <add>, %109, %cst_35 [1] : vector<8x8xf32> to vector<8xf32>
      %111 = vector.shape_cast %110 : vector<8xf32> to vector<8x1xf32>
      %112 = tpu.reciprocal %111 {approx = true} : vector<8x1xf32> -> vector<8x1xf32>
      %113 = vector.broadcast %112 : vector<8x1xf32> to vector<8x8xf32>
      %114 = arith.mulf %109, %113 : vector<8x8xf32>
      %115 = arith.truncf %114 : vector<8x8xf32> to vector<8x8xbf16>
      %cst_36 = arith.constant dense<0.000000e+00> : vector<8x8xf32>
      %116 = tpu.matmul %115, %101, %cst_36 {dimension_numbers = #tpu.dot_dimension_numbers<[1], [0], [0], [1], [0, 0, 1, 1], [], []>} : vector<8x8xbf16>, vector<8x8xbf16>, vector<8x8xf32> -> vector<8x8xf32>
      %117 = vector.extract_strided_slice %62 {offsets = [0, 24], sizes = [8, 8], strides = [1, 1]} : vector<8x96xbf16> to vector<8x8xbf16>
      %118 = vector.extract_strided_slice %62 {offsets = [0, 56], sizes = [8, 8], strides = [1, 1]} : vector<8x96xbf16> to vector<8x8xbf16>
      %119 = vector.extract_strided_slice %62 {offsets = [0, 88], sizes = [8, 8], strides = [1, 1]} : vector<8x96xbf16> to vector<8x8xbf16>
      %cst_37 = arith.constant dense<0.000000e+00> : vector<8x8xf32>
      %120 = tpu.matmul %117, %118, %cst_37 {dimension_numbers = #tpu.dot_dimension_numbers<[1], [1], [0], [0], [0, 0, 1, 0], [], []>} : vector<8x8xbf16>, vector<8x8xbf16>, vector<8x8xf32> -> vector<8x8xf32>
      %121 = vector.broadcast %33 : vector<1x8xf32> to vector<8x8xf32>
      %122 = arith.addf %120, %121 : vector<8x8xf32>
      %cst_38 = arith.constant dense<0xFF800000> : vector<8xf32>
      %123 = vector.multi_reduction <maximumf>, %122, %cst_38 [1] : vector<8x8xf32> to vector<8xf32>
      %124 = vector.shape_cast %123 : vector<8xf32> to vector<8x1xf32>
      %125 = vector.broadcast %124 : vector<8x1xf32> to vector<8x8xf32>
      %126 = arith.subf %122, %125 : vector<8x8xf32>
      %127 = math.exp %126 : vector<8x8xf32>
      %cst_39 = arith.constant dense<0.000000e+00> : vector<8xf32>
      %128 = vector.multi_reduction <add>, %127, %cst_39 [1] : vector<8x8xf32> to vector<8xf32>
      %129 = vector.shape_cast %128 : vector<8xf32> to vector<8x1xf32>
      %130 = tpu.reciprocal %129 {approx = true} : vector<8x1xf32> -> vector<8x1xf32>
      %131 = vector.broadcast %130 : vector<8x1xf32> to vector<8x8xf32>
      %132 = arith.mulf %127, %131 : vector<8x8xf32>
      %133 = arith.truncf %132 : vector<8x8xf32> to vector<8x8xbf16>
      %cst_40 = arith.constant dense<0.000000e+00> : vector<8x8xf32>
      %134 = tpu.matmul %133, %119, %cst_40 {dimension_numbers = #tpu.dot_dimension_numbers<[1], [0], [0], [1], [0, 0, 1, 1], [], []>} : vector<8x8xbf16>, vector<8x8xbf16>, vector<8x8xf32> -> vector<8x8xf32>
      %135 = tpu.concatenate %80, %98, %116, %134 in 1 : vector<8x8xf32>, vector<8x8xf32>, vector<8x8xf32>, vector<8x8xf32> -> vector<8x32xf32>
      %136 = arith.truncf %135 : vector<8x32xf32> to vector<8x32xbf16>
      %137 = arith.index_cast %arg11 : i32 to index
      %c0_41 = arith.constant 0 : index
      %c0_42 = arith.constant 0 : index
      %138 = vector.load %arg6[%137, %c0_41, %c0_42] : memref<2x32x32xbf16, #tpu.memory_space<vmem>>, vector<1x32x32xbf16>
      %139 = vector.shape_cast %138 : vector<1x32x32xbf16> to vector<32x32xbf16>
      %cst_43 = arith.constant dense<0.000000e+00> : vector<8x32xf32>
      %140 = tpu.matmul %136, %139, %cst_43 {dimension_numbers = #tpu.dot_dimension_numbers<[1], [0], [0], [1], [0, 0, 1, 1], [], []>} : vector<8x32xbf16>, vector<32x32xbf16>, vector<8x32xf32> -> vector<8x32xf32>
      %141 = vector.broadcast %48 : vector<1x32xf32> to vector<8x32xf32>
      %142 = arith.addf %140, %141 : vector<8x32xf32>
      %143 = arith.addf %arg12, %142 : vector<8x32xf32>
      %cst_44 = arith.constant dense<0.000000e+00> : vector<8xf32>
      %144 = vector.multi_reduction <add>, %143, %cst_44 [1] : vector<8x32xf32> to vector<8xf32>
      %145 = vector.shape_cast %144 : vector<8xf32> to vector<8x1xf32>
      %cst_45 = arith.constant 3.200000e+01 : f32
      %146 = vector.broadcast %cst_45 : f32 to vector<8x1xf32>
      %147 = arith.divf %145, %146 : vector<8x1xf32>
      %148 = vector.broadcast %147 : vector<8x1xf32> to vector<8x32xf32>
      %149 = arith.subf %143, %148 : vector<8x32xf32>
      %150 = arith.mulf %149, %149 : vector<8x32xf32>
      %cst_46 = arith.constant dense<0.000000e+00> : vector<8xf32>
      %151 = vector.multi_reduction <add>, %150, %cst_46 [1] : vector<8x32xf32> to vector<8xf32>
      %152 = vector.shape_cast %151 : vector<8xf32> to vector<8x1xf32>
      %cst_47 = arith.constant 3.200000e+01 : f32
      %153 = vector.broadcast %cst_47 : f32 to vector<8x1xf32>
      %154 = arith.divf %152, %153 : vector<8x1xf32>
      %155 = vector.broadcast %147 : vector<8x1xf32> to vector<8x32xf32>
      %156 = arith.subf %143, %155 : vector<8x32xf32>
      %cst_48 = arith.constant 9.99999996E-13 : f32
      %157 = vector.broadcast %cst_48 : f32 to vector<8x1xf32>
      %158 = arith.addf %154, %157 : vector<8x1xf32>
      %159 = math.rsqrt %158 : vector<8x1xf32>
      %160 = vector.broadcast %159 : vector<8x1xf32> to vector<8x32xf32>
      %161 = arith.mulf %156, %160 : vector<8x32xf32>
      %162 = vector.broadcast %49 : vector<1x32xf32> to vector<8x32xf32>
      %163 = arith.mulf %161, %162 : vector<8x32xf32>
      %164 = vector.broadcast %50 : vector<1x32xf32> to vector<8x32xf32>
      %165 = arith.addf %163, %164 : vector<8x32xf32>
      %166 = arith.truncf %165 : vector<8x32xf32> to vector<8x32xbf16>
      %167 = arith.index_cast %arg11 : i32 to index
      %c0_49 = arith.constant 0 : index
      %c0_50 = arith.constant 0 : index
      %168 = vector.load %arg7[%167, %c0_49, %c0_50] : memref<2x32x64xbf16, #tpu.memory_space<vmem>>, vector<1x32x64xbf16>
      %169 = vector.shape_cast %168 : vector<1x32x64xbf16> to vector<32x64xbf16>
      %cst_51 = arith.constant dense<0.000000e+00> : vector<8x64xf32>
      %170 = tpu.matmul %166, %169, %cst_51 {dimension_numbers = #tpu.dot_dimension_numbers<[1], [0], [0], [1], [0, 0, 1, 1], [], []>} : vector<8x32xbf16>, vector<32x64xbf16>, vector<8x64xf32> -> vector<8x64xf32>
      %171 = vector.broadcast %51 : vector<1x64xf32> to vector<8x64xf32>
      %172 = arith.addf %170, %171 : vector<8x64xf32>
      %173 = arith.mulf %172, %172 : vector<8x64xf32>
      %174 = arith.mulf %172, %173 : vector<8x64xf32>
      %cst_52 = arith.constant 4.471500e-02 : f32
      %175 = vector.broadcast %cst_52 : f32 to vector<8x64xf32>
      %176 = arith.mulf %175, %174 : vector<8x64xf32>
      %177 = arith.addf %172, %176 : vector<8x64xf32>
      %cst_53 = arith.constant 0.797884583 : f32
      %178 = vector.broadcast %cst_53 : f32 to vector<8x64xf32>
      %179 = arith.mulf %178, %177 : vector<8x64xf32>
      %180 = math.tanh %179 : vector<8x64xf32>
      %cst_54 = arith.constant 1.000000e+00 : f32
      %181 = vector.broadcast %cst_54 : f32 to vector<8x64xf32>
      %182 = arith.addf %181, %180 : vector<8x64xf32>
      %cst_55 = arith.constant 5.000000e-01 : f32
      %183 = vector.broadcast %cst_55 : f32 to vector<8x64xf32>
      %184 = arith.mulf %183, %182 : vector<8x64xf32>
      %185 = arith.mulf %172, %184 : vector<8x64xf32>
      %186 = arith.truncf %185 : vector<8x64xf32> to vector<8x64xbf16>
      %187 = arith.index_cast %arg11 : i32 to index
      %c0_56 = arith.constant 0 : index
      %c0_57 = arith.constant 0 : index
      %188 = vector.load %arg8[%187, %c0_56, %c0_57] : memref<2x64x32xbf16, #tpu.memory_space<vmem>>, vector<1x64x32xbf16>
      %189 = vector.shape_cast %188 : vector<1x64x32xbf16> to vector<64x32xbf16>
      %cst_58 = arith.constant dense<0.000000e+00> : vector<8x32xf32>
      %190 = tpu.matmul %186, %189, %cst_58 {dimension_numbers = #tpu.dot_dimension_numbers<[1], [0], [0], [1], [0, 0, 1, 1], [], []>} : vector<8x64xbf16>, vector<64x32xbf16>, vector<8x32xf32> -> vector<8x32xf32>
      %191 = vector.broadcast %52 : vector<1x32xf32> to vector<8x32xf32>
      %192 = arith.addf %190, %191 : vector<8x32xf32>
      %193 = arith.addf %165, %192 : vector<8x32xf32>
      %cst_59 = arith.constant dense<0.000000e+00> : vector<8xf32>
      %194 = vector.multi_reduction <add>, %193, %cst_59 [1] : vector<8x32xf32> to vector<8xf32>
      %195 = vector.shape_cast %194 : vector<8xf32> to vector<8x1xf32>
      %cst_60 = arith.constant 3.200000e+01 : f32
      %196 = vector.broadcast %cst_60 : f32 to vector<8x1xf32>
      %197 = arith.divf %195, %196 : vector<8x1xf32>
      %198 = vector.broadcast %197 : vector<8x1xf32> to vector<8x32xf32>
      %199 = arith.subf %193, %198 : vector<8x32xf32>
      %200 = arith.mulf %199, %199 : vector<8x32xf32>
      %cst_61 = arith.constant dense<0.000000e+00> : vector<8xf32>
      %201 = vector.multi_reduction <add>, %200, %cst_61 [1] : vector<8x32xf32> to vector<8xf32>
      %202 = vector.shape_cast %201 : vector<8xf32> to vector<8x1xf32>
      %cst_62 = arith.constant 3.200000e+01 : f32
      %203 = vector.broadcast %cst_62 : f32 to vector<8x1xf32>
      %204 = arith.divf %202, %203 : vector<8x1xf32>
      %205 = vector.broadcast %197 : vector<8x1xf32> to vector<8x32xf32>
      %206 = arith.subf %193, %205 : vector<8x32xf32>
      %cst_63 = arith.constant 9.99999996E-13 : f32
      %207 = vector.broadcast %cst_63 : f32 to vector<8x1xf32>
      %208 = arith.addf %204, %207 : vector<8x1xf32>
      %209 = math.rsqrt %208 : vector<8x1xf32>
      %210 = vector.broadcast %209 : vector<8x1xf32> to vector<8x32xf32>
      %211 = arith.mulf %206, %210 : vector<8x32xf32>
      %212 = vector.broadcast %53 : vector<1x32xf32> to vector<8x32xf32>
      %213 = arith.mulf %211, %212 : vector<8x32xf32>
      %214 = vector.broadcast %54 : vector<1x32xf32> to vector<8x32xf32>
      %215 = arith.addf %213, %214 : vector<8x32xf32>
      scf.yield %215 : vector<8x32xf32>
    }
    %c2_i32_13 = arith.constant 2 : i32
    %36 = arith.truncf %35 : vector<8x32xf32> to vector<8x32xbf16>
    %c0_14 = arith.constant 0 : index
    %c0_15 = arith.constant 0 : index
    %37 = vector.load %arg9[%c0_14, %c0_15] : memref<32x128xbf16, #tpu.memory_space<vmem>>, vector<32x128xbf16>
    %cst_16 = arith.constant dense<0.000000e+00> : vector<8x128xf32>
    %38 = tpu.matmul %36, %37, %cst_16 {dimension_numbers = #tpu.dot_dimension_numbers<[1], [0], [0], [1], [0, 0, 1, 1], [], []>} : vector<8x32xbf16>, vector<32x128xbf16>, vector<8x128xf32> -> vector<8x128xf32>
    %39 = vector.broadcast %3 : vector<1x128xf32> to vector<8x128xf32>
    %40 = arith.addf %38, %39 : vector<8x128xf32>
    %c0_17 = arith.constant 0 : index
    %c0_18 = arith.constant 0 : index
    %c0_19 = arith.constant 0 : index
    %41 = vector.load %arg10[%c0_17, %c0_18, %c0_19] : memref<1x8x128xf32, #tpu.memory_space<vmem>>, vector<1x8x128xf32>
    %42 = vector.shape_cast %41 : vector<1x8x128xf32> to vector<8x128xf32>
    %43 = vector.shape_cast %40 : vector<8x128xf32> to vector<1x8x128xf32>
    tpu.vector_store %arg10[%c0_17, %c0_18, %c0_19], %43 {strides = array<i32>} : memref<1x8x128xf32, #tpu.memory_space<vmem>>, vector<1x8x128xf32>,
    return
  }
  func.func @transform_0(%arg0: i32) -> (i32, i32) {
    %c0_i32 = arith.constant 0 : i32
    %c0_i32_0 = arith.constant 0 : i32
    return %arg0, %c0_i32 : i32, i32
  }
  func.func @transform_1(%arg0: i32) -> (i32, i32, i32) {
    %c0_i32 = arith.constant 0 : i32
    %c0_i32_0 = arith.constant 0 : i32
    %c0_i32_1 = arith.constant 0 : i32
    return %arg0, %c0_i32, %c0_i32_0 : i32, i32, i32
  }
  func.func @transform_2(%arg0: i32) -> (i32, i32) {
    %c0_i32 = arith.constant 0 : i32
    %c0_i32_0 = arith.constant 0 : i32
    %c0_i32_1 = arith.constant 0 : i32
    return %c0_i32, %c0_i32_0 : i32, i32
  }
  func.func @transform_3(%arg0: i32) -> (i32, i32, i32) {
    %c0_i32 = arith.constant 0 : i32
    %c0_i32_0 = arith.constant 0 : i32
    %c0_i32_1 = arith.constant 0 : i32
    %c0_i32_2 = arith.constant 0 : i32
    return %c0_i32, %c0_i32_0, %c0_i32_1 : i32, i32, i32
  }
  func.func @transform_4(%arg0: i32) -> (i32, i32, i32) {
    %c0_i32 = arith.constant 0 : i32
    %c0_i32_0 = arith.constant 0 : i32
    %c0_i32_1 = arith.constant 0 : i32
    %c0_i32_2 = arith.constant 0 : i32
    return %c0_i32, %c0_i32_0, %c0_i32_1 : i32, i32, i32
  }
  func.func @transform_5(%arg0: i32) -> (i32, i32, i32) {
    %c0_i32 = arith.constant 0 : i32
    %c0_i32_0 = arith.constant 0 : i32
    %c0_i32_1 = arith.constant 0 : i32
    %c0_i32_2 = arith.constant 0 : i32
    return %c0_i32, %c0_i32_0, %c0_i32_1 : i32, i32, i32
  }
  func.func @transform_6(%arg0: i32) -> (i32, i32, i32) {
    %c0_i32 = arith.constant 0 : i32
    %c0_i32_0 = arith.constant 0 : i32
    %c0_i32_1 = arith.constant 0 : i32
    %c0_i32_2 = arith.constant 0 : i32
    return %c0_i32, %c0_i32_0, %c0_i32_1 : i32, i32, i32
  }
  func.func @transform_7(%arg0: i32) -> (i32, i32, i32) {
    %c0_i32 = arith.constant 0 : i32
    %c0_i32_0 = arith.constant 0 : i32
    %c0_i32_1 = arith.constant 0 : i32
    %c0_i32_2 = arith.constant 0 : i32
    return %c0_i32, %c0_i32_0, %c0_i32_1 : i32, i32, i32
  }
  func.func @transform_8(%arg0: i32) -> (i32, i32) {
    %c0_i32 = arith.constant 0 : i32
    %c0_i32_0 = arith.constant 0 : i32
    %c0_i32_1 = arith.constant 0 : i32
    return %c0_i32, %c0_i32_0 : i32, i32
  }
  func.func @transform_9(%arg0: i32) -> (i32, i32, i32) {
    %c0_i32 = arith.constant 0 : i32
    %c0_i32_0 = arith.constant 0 : i32
    %c0_i32_1 = arith.constant 0 : i32
    return %arg0, %c0_i32, %c0_i32_0 : i32, i32, i32
  }
}

</mosaic_0001>

<llo_original>
// kernel: sentence_transformer_with_projection.1
$region0: #{sentence_transformer_with_projection.1}
  #allocation0 [shape = 'u32[]', space=smem, size = 0x4, offset = 0x4, fixed_abs, tag = 'smem constant byte address 0x4 - core index']
  #allocation1 [shape = 'u32[144,128]{1,0:T(1,128)}', space=vmem, size = 0x12000, scoped, tag = 'internal scratch']
  %s0 = inlined_call_operand.vmem [shape: f32[16,32], index: 0, kind: input, shape index: {}]
  %s1 = inlined_call_operand.vmem [shape: f32[2,1,8], index: 1, kind: input, shape index: {}]
  %s2 = inlined_call_operand.vmem [shape: f32[8,128], index: 2, kind: input, shape index: {}]
  %s3 = inlined_call_operand.vmem [shape: f32[2,8,128], index: 3, kind: input, shape index: {}]
  %s4 = inlined_call_operand.vmem [shape: bf16[2,32,96], index: 4, kind: input, shape index: {}]
  %s5 = inlined_call_operand.vmem [shape: bf16[2,32,32], index: 5, kind: input, shape index: {}]
  %s6 = inlined_call_operand.vmem [shape: bf16[2,32,64], index: 6, kind: input, shape index: {}]
  %s7 = inlined_call_operand.vmem [shape: bf16[2,64,32], index: 7, kind: input, shape index: {}]
  %s8 = inlined_call_operand.vmem [shape: bf16[32,128], index: 8, kind: input, shape index: {}]
  %s9 = inlined_call_operand.vmem [shape: f32[2,8,128], index: 9, kind: output, shape index: {}]
  %s10 = sld [smem:[#allocation0]]
  $region76: #{sentence_transformer_with_projection.1} parent=0
    _
  %s12 = ssub.s32 1, %s10
  %s13 = scalar_select 0, %s12, %s10
  loop: start=0, step=1, limit=4
  $region2: #{sentence_transformer_with_projection.1} parent=0 // loop_pre_header
    _
  $region3: #{sentence_transformer_with_projection.1} parent=0 // loop_header
    %s15 = sphi 0, %s19
    %p16 = scmp.ge.s32.totalorder %s15, 4
    %s25 = sphi 0, %s27
    %s28 = sphi 0, %s25
    %s29 = sphi 0, %s28
    %s45 = sphi 0, %s29
    %s51 = sphi 0, %s53
    %s54 = sphi 0, %s51
    %s55 = sphi 0, %s54
    %s71 = sphi 0, %s55
    %s75 = sphi 0, %s75
    %s77 = sphi 0, %s75
    %s78 = sphi 0, %s77
    %s92 = sphi 0, %s78
    %s96 = sphi 0, %s96
    %s98 = sphi 0, %s96
    %s99 = sphi 0, %s98
    %s113 = sphi 0, %s99
    %s117 = sphi 0, %s117
    %s119 = sphi 0, %s117
    %s120 = sphi 0, %s119
    %s134 = sphi 0, %s120
    %s138 = sphi 0, %s138
    %s140 = sphi 0, %s138
    %s141 = sphi 0, %s140
    %s155 = sphi 0, %s141
    %s159 = sphi 0, %s159
    %s161 = sphi 0, %s159
    %s162 = sphi 0, %s161
    %s176 = sphi 0, %s162
    %s180 = sphi 0, %s180
    %s182 = sphi 0, %s180
    %s183 = sphi 0, %s182
    %s197 = sphi 0, %s183
    %s201 = sphi 0, %s201
    %s203 = sphi 0, %s201
    %s204 = sphi 0, %s203
    %s218 = sphi 0, %s204
    %s224 = sphi 0, %s226
    %s227 = sphi 0, %s224
    %s228 = sphi 0, %s227
    %s244 = sphi 0, %s228
  $region4: #{sentence_transformer_with_projection.1} parent=0 // loop_header_branch
    %18 = sbr.rel (%p16) target = $region8
  $region5: #{sentence_transformer_with_projection.1} parent=0 // loop_body
    %s20 = ssub.s32 %s15, 1
    %s21 = ssub.s32 %s15, 2
    %s22 = sadd.s32 %s15, 1
    %s23 = ssub.s32 %s15, %s22
    %p24 = scmp.eq.s32.totalorder %s23, 0
    %s26 = sadd.s32 %s25, 1
    %s27 = scalar_select %p24, %s25, %s26
    %p30 = pneg %p24
    %p31 = scmp.eq.s32.totalorder %s15, 1
    %p32 = por %p30, %p31
    %p33 = scmp.ne.s32.totalorder %s25, %s28
    %p34 = scmp.eq.s32.totalorder %s15, 0
    %p35 = por %p33, %p34
    %p36 = scmp.ne.s32.totalorder %s25, %s28
    %p37 = scmp.eq.s32.totalorder %s20, 1
    %p38 = por %p36, %p37
    %p39 = scmp.ne.s32.totalorder %s28, %s29
    %p40 = scmp.eq.s32.totalorder %s20, 0
    %p41 = por %p39, %p40
    %p42 = scmp.ne.s32.totalorder %s28, %s29
    %p43 = scmp.eq.s32.totalorder %s21, 1
    %p44 = por %p42, %p43
    %p46 = scmp.ne.s32.totalorder %s29, %s45
    %p47 = scmp.eq.s32.totalorder %s21, 0
    %p48 = por %p46, %p47
    %s49 = ssub.s32 %s15, %s22
    %p50 = scmp.eq.s32.totalorder %s49, 0
    %s52 = sadd.s32 %s51, 1
    %s53 = scalar_select %p50, %s51, %s52
    %p56 = pneg %p50
    %p57 = scmp.eq.s32.totalorder %s15, 1
    %p58 = por %p56, %p57
    %p59 = scmp.ne.s32.totalorder %s51, %s54
    %p60 = scmp.eq.s32.totalorder %s15, 0
    %p61 = por %p59, %p60
    %p62 = scmp.ne.s32.totalorder %s51, %s54
    %p63 = scmp.eq.s32.totalorder %s20, 1
    %p64 = por %p62, %p63
    %p65 = scmp.ne.s32.totalorder %s54, %s55
    %p66 = scmp.eq.s32.totalorder %s20, 0
    %p67 = por %p65, %p66
    %p68 = scmp.ne.s32.totalorder %s54, %s55
    %p69 = scmp.eq.s32.totalorder %s21, 1
    %p70 = por %p68, %p69
    %p72 = scmp.ne.s32.totalorder %s55, %s71
    %p73 = scmp.eq.s32.totalorder %s21, 0
    %p74 = por %p72, %p73
    %s76 = sadd.s32 %s75, 1
    %p79 = scmp.eq.s32.totalorder %s15, 1
    %p80 = scmp.ne.s32.totalorder %s75, %s77
    %p81 = scmp.eq.s32.totalorder %s15, 0
    %p82 = por %p80, %p81
    %p83 = scmp.ne.s32.totalorder %s75, %s77
    %p84 = scmp.eq.s32.totalorder %s20, 1
    %p85 = por %p83, %p84
    %p86 = scmp.ne.s32.totalorder %s77, %s78
    %p87 = scmp.eq.s32.totalorder %s20, 0
    %p88 = por %p86, %p87
    %p89 = scmp.ne.s32.totalorder %s77, %s78
    %p90 = scmp.eq.s32.totalorder %s21, 1
    %p91 = por %p89, %p90
    %p93 = scmp.ne.s32.totalorder %s78, %s92
    %p94 = scmp.eq.s32.totalorder %s21, 0
    %p95 = por %p93, %p94
    %s97 = sadd.s32 %s96, 1
    %p100 = scmp.eq.s32.totalorder %s15, 1
    %p101 = scmp.ne.s32.totalorder %s96, %s98
    %p102 = scmp.eq.s32.totalorder %s15, 0
    %p103 = por %p101, %p102
    %p104 = scmp.ne.s32.totalorder %s96, %s98
    %p105 = scmp.eq.s32.totalorder %s20, 1
    %p106 = por %p104, %p105
    %p107 = scmp.ne.s32.totalorder %s98, %s99
    %p108 = scmp.eq.s32.totalorder %s20, 0
    %p109 = por %p107, %p108
    %p110 = scmp.ne.s32.totalorder %s98, %s99
    %p111 = scmp.eq.s32.totalorder %s21, 1
    %p112 = por %p110, %p111
    %p114 = scmp.ne.s32.totalorder %s99, %s113
    %p115 = scmp.eq.s32.totalorder %s21, 0
    %p116 = por %p114, %p115
    %s118 = sadd.s32 %s117, 1
    %p121 = scmp.eq.s32.totalorder %s15, 1
    %p122 = scmp.ne.s32.totalorder %s117, %s119
    %p123 = scmp.eq.s32.totalorder %s15, 0
    %p124 = por %p122, %p123
    %p125 = scmp.ne.s32.totalorder %s117, %s119
    %p126 = scmp.eq.s32.totalorder %s20, 1
    %p127 = por %p125, %p126
    %p128 = scmp.ne.s32.totalorder %s119, %s120
    %p129 = scmp.eq.s32.totalorder %s20, 0
    %p130 = por %p128, %p129
    %p131 = scmp.ne.s32.totalorder %s119, %s120
    %p132 = scmp.eq.s32.totalorder %s21, 1
    %p133 = por %p131, %p132
    %p135 = scmp.ne.s32.totalorder %s120, %s134
    %p136 = scmp.eq.s32.totalorder %s21, 0
    %p137 = por %p135, %p136
    %s139 = sadd.s32 %s138, 1
    %p142 = scmp.eq.s32.totalorder %s15, 1
    %p143 = scmp.ne.s32.totalorder %s138, %s140
    %p144 = scmp.eq.s32.totalorder %s15, 0
    %p145 = por %p143, %p144
    %p146 = scmp.ne.s32.totalorder %s138, %s140
    %p147 = scmp.eq.s32.totalorder %s20, 1
    %p148 = por %p146, %p147
    %p149 = scmp.ne.s32.totalorder %s140, %s141
    %p150 = scmp.eq.s32.totalorder %s20, 0
    %p151 = por %p149, %p150
    %p152 = scmp.ne.s32.totalorder %s140, %s141
    %p153 = scmp.eq.s32.totalorder %s21, 1
    %p154 = por %p152, %p153
    %p156 = scmp.ne.s32.totalorder %s141, %s155
    %p157 = scmp.eq.s32.totalorder %s21, 0
    %p158 = por %p156, %p157
    %s160 = sadd.s32 %s159, 1
    %p163 = scmp.eq.s32.totalorder %s15, 1
    %p164 = scmp.ne.s32.totalorder %s159, %s161
    %p165 = scmp.eq.s32.totalorder %s15, 0
    %p166 = por %p164, %p165
    %p167 = scmp.ne.s32.totalorder %s159, %s161
    %p168 = scmp.eq.s32.totalorder %s20, 1
    %p169 = por %p167, %p168
    %p170 = scmp.ne.s32.totalorder %s161, %s162
    %p171 = scmp.eq.s32.totalorder %s20, 0
    %p172 = por %p170, %p171
    %p173 = scmp.ne.s32.totalorder %s161, %s162
    %p174 = scmp.eq.s32.totalorder %s21, 1
    %p175 = por %p173, %p174
    %p177 = scmp.ne.s32.totalorder %s162, %s176
    %p178 = scmp.eq.s32.totalorder %s21, 0
    %p179 = por %p177, %p178
    %s181 = sadd.s32 %s180, 1
    %p184 = scmp.eq.s32.totalorder %s15, 1
    %p185 = scmp.ne.s32.totalorder %s180, %s182
    %p186 = scmp.eq.s32.totalorder %s15, 0
    %p187 = por %p185, %p186
    %p188 = scmp.ne.s32.totalorder %s180, %s182
    %p189 = scmp.eq.s32.totalorder %s20, 1
    %p190 = por %p188, %p189
    %p191 = scmp.ne.s32.totalorder %s182, %s183
    %p192 = scmp.eq.s32.totalorder %s20, 0
    %p193 = por %p191, %p192
    %p194 = scmp.ne.s32.totalorder %s182, %s183
    %p195 = scmp.eq.s32.totalorder %s21, 1
    %p196 = por %p194, %p195
    %p198 = scmp.ne.s32.totalorder %s183, %s197
    %p199 = scmp.eq.s32.totalorder %s21, 0
    %p200 = por %p198, %p199
    %s202 = sadd.s32 %s201, 1
    %p205 = scmp.eq.s32.totalorder %s15, 1
    %p206 = scmp.ne.s32.totalorder %s201, %s203
    %p207 = scmp.eq.s32.totalorder %s15, 0
    %p208 = por %p206, %p207
    %p209 = scmp.ne.s32.totalorder %s201, %s203
    %p210 = scmp.eq.s32.totalorder %s20, 1
    %p211 = por %p209, %p210
    %p212 = scmp.ne.s32.totalorder %s203, %s204
    %p213 = scmp.eq.s32.totalorder %s20, 0
    %p214 = por %p212, %p213
    %p215 = scmp.ne.s32.totalorder %s203, %s204
    %p216 = scmp.eq.s32.totalorder %s21, 1
    %p217 = por %p215, %p216
    %p219 = scmp.ne.s32.totalorder %s204, %s218
    %p220 = scmp.eq.s32.totalorder %s21, 0
    %p221 = por %p219, %p220
    %s222 = ssub.s32 %s15, %s22
    %p223 = scmp.eq.s32.totalorder %s222, 0
    %s225 = sadd.s32 %s224, 1
    %s226 = scalar_select %p223, %s224, %s225
    %p229 = pneg %p223
    %p230 = scmp.eq.s32.totalorder %s15, 1
    %p231 = por %p229, %p230
    %p232 = scmp.ne.s32.totalorder %s224, %s227
    %p233 = scmp.eq.s32.totalorder %s15, 0
    %p234 = por %p232, %p233
    %p235 = scmp.ne.s32.totalorder %s224, %s227
    %p236 = scmp.eq.s32.totalorder %s20, 1
    %p237 = por %p235, %p236
    %p238 = scmp.ne.s32.totalorder %s227, %s228
    %p239 = scmp.eq.s32.totalorder %s20, 0
    %p240 = por %p238, %p239
    %p241 = scmp.ne.s32.totalorder %s227, %s228
    %p242 = scmp.eq.s32.totalorder %s21, 1
    %p243 = por %p241, %p242
    %p245 = scmp.ne.s32.totalorder %s228, %s244
    %p246 = scmp.eq.s32.totalorder %s21, 0
    %p247 = por %p245, %p246
    %p248 = scmp.le.s32.totalorder 1, %s15
    %p249 = scmp.lt.s32.totalorder %s15, 3
    %p250 = pnand %p248, %p249
    %p251 = pneg %p250
    // Predicated region
    $region9: #{sentence_transformer_with_projection.1} parent=5 // pred_check
      _
    $region10: #{sentence_transformer_with_projection.1} parent=5 // pred_check_branch
      %253 = sbr.rel (%p250) target = $region12
    $region11: #{sentence_transformer_with_projection.1} parent=5 // pred_region
      %s254 = ssub.s32 %s15, 1
      // Predicated region
      $region13: #{sentence_transformer_with_projection.1} parent=11 // pred_check
        %p255 = pneg %p88
      $region14: #{sentence_transformer_with_projection.1} parent=11 // pred_check_branch
        %257 = sbr.rel (%p255) target = $region16
      $region15: #{sentence_transformer_with_projection.1} parent=11 // pred_region
        _
      $region16: #{sentence_transformer_with_projection.1} parent=11 // pred_fallthru
        _
      // Predicated region
      $region17: #{sentence_transformer_with_projection.1} parent=11 // pred_check
        %p258 = pneg %p109
      $region18: #{sentence_transformer_with_projection.1} parent=11 // pred_check_branch
        %260 = sbr.rel (%p258) target = $region20
      $region19: #{sentence_transformer_with_projection.1} parent=11 // pred_region
        _
      $region20: #{sentence_transformer_with_projection.1} parent=11 // pred_fallthru
        _
      // Predicated region
      $region21: #{sentence_transformer_with_projection.1} parent=11 // pred_check
        %p261 = pneg %p130
      $region22: #{sentence_transformer_with_projection.1} parent=11 // pred_check_branch
        %263 = sbr.rel (%p261) target = $region24
      $region23: #{sentence_transformer_with_projection.1} parent=11 // pred_region
        _
      $region24: #{sentence_transformer_with_projection.1} parent=11 // pred_fallthru
        _
      // Predicated region
      $region25: #{sentence_transformer_with_projection.1} parent=11 // pred_check
        %p264 = pneg %p151
      $region26: #{sentence_transformer_with_projection.1} parent=11 // pred_check_branch
        %266 = sbr.rel (%p264) target = $region28
      $region27: #{sentence_transformer_with_projection.1} parent=11 // pred_region
        _
      $region28: #{sentence_transformer_with_projection.1} parent=11 // pred_fallthru
        _
      // Predicated region
      $region29: #{sentence_transformer_with_projection.1} parent=11 // pred_check
        %p267 = pneg %p172
      $region30: #{sentence_transformer_with_projection.1} parent=11 // pred_check_branch
        %269 = sbr.rel (%p267) target = $region32
      $region31: #{sentence_transformer_with_projection.1} parent=11 // pred_region
        _
      $region32: #{sentence_transformer_with_projection.1} parent=11 // pred_fallthru
        _
      // Predicated region
      $region33: #{sentence_transformer_with_projection.1} parent=11 // pred_check
        %p270 = pneg %p193
      $region34: #{sentence_transformer_with_projection.1} parent=11 // pred_check_branch
        %272 = sbr.rel (%p270) target = $region36
      $region35: #{sentence_transformer_with_projection.1} parent=11 // pred_region
        _
      $region36: #{sentence_transformer_with_projection.1} parent=11 // pred_fallthru
        _
      // Predicated region
      $region37: #{sentence_transformer_with_projection.1} parent=11 // pred_check
        %p273 = pneg %p214
      $region38: #{sentence_transformer_with_projection.1} parent=11 // pred_check_branch
        %275 = sbr.rel (%p273) target = $region40
      $region39: #{sentence_transformer_with_projection.1} parent=11 // pred_region
        _
      $region40: #{sentence_transformer_with_projection.1} parent=11 // pred_fallthru
        _
    $region12: #{sentence_transformer_with_projection.1} parent=5 // pred_fallthru
      _
    %p276 = scmp.lt.s32.totalorder %s15, 2
    // Predicated region
    $region41: #{sentence_transformer_with_projection.1} parent=5 // pred_check
      %p277 = pneg %p276
    $region42: #{sentence_transformer_with_projection.1} parent=5 // pred_check_branch
      %279 = sbr.rel (%p277) target = $region44
    $region43: #{sentence_transformer_with_projection.1} parent=5 // pred_region
      // Predicated region
      $region45: #{sentence_transformer_with_projection.1} parent=43 // pred_check
        %p280 = pneg %p35
      $region46: #{sentence_transformer_with_projection.1} parent=43 // pred_check_branch
        %282 = sbr.rel (%p280) target = $region48
      $region47: #{sentence_transformer_with_projection.1} parent=43 // pred_region
        %p283 = scmp.lt.s32.totalorder %s15, 1
        %s284 = scalar_select %p283, %s15, 1
        %s285 = smul.addr %s284, 8
        %s286 = scalar_lea.vmem %s0, %s285
      $region48: #{sentence_transformer_with_projection.1} parent=43 // pred_fallthru
        _
      // Predicated region
      $region49: #{sentence_transformer_with_projection.1} parent=43 // pred_check
        %p287 = pneg %p61
      $region50: #{sentence_transformer_with_projection.1} parent=43 // pred_check_branch
        %289 = sbr.rel (%p287) target = $region52
      $region51: #{sentence_transformer_with_projection.1} parent=43 // pred_region
        %p290 = scmp.lt.s32.totalorder %s15, 1
        %s291 = scalar_select %p290, %s15, 1
        %s292 = scalar_lea.vmem %s1, %s291
      $region52: #{sentence_transformer_with_projection.1} parent=43 // pred_fallthru
        _
    $region44: #{sentence_transformer_with_projection.1} parent=5 // pred_fallthru
      _
    %p293 = scmp.le.s32.totalorder 1, %s15
    %p294 = scmp.lt.s32.totalorder %s15, 3
    %p295 = pnand %p293, %p294
    %p296 = pneg %p295
    // Predicated region
    $region53: #{sentence_transformer_with_projection.1} parent=5 // pred_check
      _
    $region54: #{sentence_transformer_with_projection.1} parent=5 // pred_check_branch
      %298 = sbr.rel (%p295) target = $region56
    $region55: #{sentence_transformer_with_projection.1} parent=5 // pred_region
      %s299 = ssub.s32 %s15, 1
      %p300 = scmp.lt.s32.totalorder %s20, 1
      %s301 = scalar_select %p300, %s20, 1
      %s302 = smul.addr %s301, 8
      %s303 = scalar_lea.vmem %s0, %s302
      %p304 = pneg %p41
      %p305 = pneg %p38
      %p306 = scmp.lt.s32.totalorder %s20, 1
      %s307 = scalar_select %p306, %s20, 1
      %s308 = scalar_lea.vmem %s1, %s307
      %p309 = pneg %p67
      %p310 = pneg %p64
      %p311 = pneg %p88
      %p312 = pneg %p85
      %p313 = pneg %p109
      %p314 = pneg %p106
      %p315 = pneg %p130
      %p316 = pneg %p127
      %p317 = pneg %p151
      %p318 = pneg %p148
      %p319 = pneg %p172
      %p320 = pneg %p169
      %p321 = pneg %p193
      %p322 = pneg %p190
      %p323 = pneg %p214
      %p324 = pneg %p211
      %p325 = pneg %p240
      %p326 = pneg %p237
      %p327 = scmp.lt.s32.totalorder %s20, 1
      %s328 = scalar_select %p327, %s20, 1
      %s329 = smul.addr %s328, 8
      %s330 = scalar_lea.vmem %s9, %s329
      %p331 = scmp.lt.s32.totalorder %s20, 1
      %s332 = scalar_select %p331, %s20, 1
      %s333 = smul.addr %s332, 8
      %s334 = scalar_lea.vmem %s0, %s333
      %p335 = scmp.lt.s32.totalorder %s20, 1
      %s336 = scalar_select %p335, %s20, 1
      %s337 = scalar_lea.vmem %s1, %s336
      %p338 = scmp.lt.s32.totalorder %s20, 1
      %s339 = scalar_select %p338, %s20, 1
      %s340 = smul.addr %s339, 8
      %s341 = scalar_lea.vmem %s9, %s340
      %v343 = vld [vmem:[%s2] sm:$0xff]
      %v344 = vld [vmem:[%s334] sm:$0xff]
      %vm345 = vcmask 261120
      %v346 = vsel %vm345, %v344, 0.0
      %347 = vadd.xlane.f32.xlu0 %v346
      %v348 = vpop.xlane.xlu0 %347
      %v349 = vrcp.pop 32.0
      %v350 = vmul.f32 %v348, %v349
      %v351 = vsub.f32 %v344, %v350
      %v352 = vmul.f32 %v351, %v351
      %v353 = vsel %vm345, %v352, 0.0
      %354 = vadd.xlane.f32.xlu0 %v353
      %v355 = vpop.xlane.xlu0 %354
      %v356 = vmul.f32 %v355, %v349
      %v357 = vadd.f32 %v356, 1e-12
      %v358 = vrsqrt.pop %v357
      %v359 = vmul.f32 %v351, %v358
      %v360 = vlaneseq
      %v361 = vshrl.u32 %v360, 7
      %v362 = vsub.s32 0, %v361
      %v363 = vrot.slane %v343, %v362
      %v364 = vmul.f32 %v359, %v363
      %v365 = vlaneseq
      %v366 = vshrl.u32 %v365, 7
      %v367 = vsub.s32 1, %v366
      %v368 = vrot.slane %v343, %v367
      %v369 = vadd.f32 %v364, %v368
      %v370 = vld [vmem:[%s337] sm:$0x1]
      %vm371 = vcmp.gt.f32.partialorder %v370, 0.0
      %v372 = vsel %vm371, 0.0, -1e+09
      loop: start=0, step=1, limit=2
      $region57: #{sentence_transformer_with_projection.1} parent=55 // loop_pre_header
        _
      $region58: #{sentence_transformer_with_projection.1} parent=55 // loop_header
        %s374 = sphi 0, %s378
        %p375 = scmp.ge.s32.totalorder %s374, 2
        %v379 = vphi %v369, %v1186
      $region59: #{sentence_transformer_with_projection.1} parent=55 // loop_header_branch
        %377 = sbr.rel (%p375) target = $region63
      $region60: #{sentence_transformer_with_projection.1} parent=55 // loop_body
        %s380 = smul.u32 %s374, 8
        %s381 = scalar_lea.vmem %s3, %s380
        %v382 = vld [vmem:[%s381] sm:$0xff]
        %v383 = vpack.c.bf16 %v379, %v379
        %s384 = smul.u32 %s374, 4
        %s385 = smul.addr %s384, 4
        %s386 = scalar_lea.vmem %s4, %s385
        %v387 = vld [vmem:[%s386] sm:$0xf]
        %v388 = vld [vmem:[%s386 + $0x4] sm:$0xf]
        %v389 = vld [vmem:[%s386 + $0x8] sm:$0xf]
        %v390 = vld [vmem:[%s386 + $0xc] sm:$0xf]
        %v391 = vlaneseq
        %v392 = vshrl.u32 %v391, 7
        %v393 = vsub.s32 0, %v392
        %v394 = vrot.slane %v382, %v393
        %v399 = vunpack.c.l.b16 %v387
        %v400 = vunpack.c.l.b16 %v388
        %v401 = vunpack.c.l.b16 %v389
        %v402 = vunpack.c.l.b16 %v390
        %v403 = vpack.c.b16 %v400, %v399
        %v404 = vpack.c.b16 %v402, %v401
        %v408 = vsel %vm345, %v383, 0
        %410 = vmatprep.subr.bf16.mxu0 0
        %411 = vmatpush1.bf16.msra.mxu0 %v403
        %412 = vmatprep.subr.bf16.mxu0 0
        %413 = vmatpush1.bf16.msra.mxu0 %v404
        %414 = vmatprep.subr.bf16.mxu0 0
        %415 = vmatpush1.bf16.msra.mxu0 0
        %416 = vmatprep.subr.bf16.mxu0 0
        %417 = vmatpush1.bf16.msra.mxu0 0
        %418 = vmatprep.subr.bf16.mxu0 0
        %419 = vmatpush1.bf16.msra.mxu0 0
        %420 = vmatprep.subr.bf16.mxu0 0
        %421 = vmatpush1.bf16.msra.mxu0 0
        %422 = vmatprep.subr.bf16.mxu0 0
        %423 = vmatpush1.bf16.msra.mxu0 0
        %424 = vmatprep.subr.bf16.mxu0 0
        %425 = vmatpush1.bf16.msra.mxu0 0
        %426 = vmatprep.subr.bf16.mxu0 0
        %427 = vmatpush1.bf16.msra.mxu0 0
        %428 = vmatprep.subr.bf16.mxu0 0
        %429 = vmatpush1.bf16.msra.mxu0 0
        %430 = vmatprep.subr.bf16.mxu0 0
        %431 = vmatpush1.bf16.msra.mxu0 0
        %432 = vmatprep.subr.bf16.mxu0 0
        %433 = vmatpush1.bf16.msra.mxu0 0
        %434 = vmatprep.subr.bf16.mxu0 0
        %435 = vmatpush1.bf16.msra.mxu0 0
        %436 = vmatprep.subr.bf16.mxu0 0
        %437 = vmatpush1.bf16.msra.mxu0 0
        %438 = vmatprep.subr.bf16.mxu0 0
        %439 = vmatpush1.bf16.msra.mxu0 0
        %440 = vmatprep.subr.bf16.mxu0 0
        %441 = vmatpush1.bf16.msra.mxu0 0
        %442 = vmatprep.mubr.bf16.mxu0 0
        %443 = vmatmul.mubr.bf16.gmra.mrb[0].mxu0 %v408
        %v444 = vpop.f32.mrb[0].mxu0
        %v445 = vadd.f32 %v394, %v444
        %v446 = vpop.f32.mrb[0].mxu0
        %v447 = vpop.f32.mrb[0].mxu0
        %v448 = vpop.f32.mrb[0].mxu0
        %449 = vdwg.mxu0
        %v450 = vpack.c.bf16 %v445, %v445
        %v452 = vlaneseq
        %v453 = vshrl.u32 %v452, 7
        %v454 = vsub.s32 0, %v453
        %v455 = vrot.slane %v372, %v454
        %458 = vrot.lane.b32.xlu0 %v450, 96
        %v459 = vpop.permute.xlu0 %458
        %vm460 = vcmask 64512
        %v462 = vsel %vm460, %v450, 0
        %v465 = vsel %vm460, %v459, 0
        %467 = vmatprep.subr.bf16.mxu0 0
        %468 = vmatpush1.bf16.xpose.msra.mxu0 %v465
        %469 = vmatprep.subr.bf16.mxu0 0
        %470 = vmatpush1.bf16.xpose.msra.mxu0 0
        %471 = vmatprep.subr.bf16.mxu0 0
        %472 = vmatpush1.bf16.xpose.msra.mxu0 0
        %473 = vmatprep.subr.bf16.mxu0 0
        %474 = vmatpush1.bf16.xpose.msra.mxu0 0
        %475 = vmatprep.subr.bf16.mxu0 0
        %476 = vmatpush1.bf16.xpose.msra.mxu0 0
        %477 = vmatprep.subr.bf16.mxu0 0
        %478 = vmatpush1.bf16.xpose.msra.mxu0 0
        %479 = vmatprep.subr.bf16.mxu0 0
        %480 = vmatpush1.bf16.xpose.msra.mxu0 0
        %481 = vmatprep.subr.bf16.mxu0 0
        %482 = vmatpush1.bf16.xpose.msra.mxu0 0
        %483 = vmatprep.subr.bf16.mxu0 0
        %484 = vmatpush1.bf16.xpose.msra.mxu0 0
        %485 = vmatprep.subr.bf16.mxu0 0
        %486 = vmatpush1.bf16.xpose.msra.mxu0 0
        %487 = vmatprep.subr.bf16.mxu0 0
        %488 = vmatpush1.bf16.xpose.msra.mxu0 0
        %489 = vmatprep.subr.bf16.mxu0 0
        %490 = vmatpush1.bf16.xpose.msra.mxu0 0
        %491 = vmatprep.subr.bf16.mxu0 0
        %492 = vmatpush1.bf16.xpose.msra.mxu0 0
        %493 = vmatprep.subr.bf16.mxu0 0
        %494 = vmatpush1.bf16.xpose.msra.mxu0 0
        %495 = vmatprep.subr.bf16.mxu0 0
        %496 = vmatpush1.bf16.xpose.msra.mxu0 0
        %497 = vmatprep.subr.bf16.mxu0 0
        %498 = vmatpush1.bf16.xpose.msra.mxu0 0
        %499 = vmatprep.mubr.bf16.mxu0 0
        %500 = vmatmul.mubr.bf16.gmra.mrb[0].mxu0 %v462
        %v501 = vpop.f32.mrb[0].mxu0
        %v502 = vadd.f32 %v455, %v501
        %v503 = vpop.f32.mrb[0].mxu0
        %v504 = vpop.f32.mrb[0].mxu0
        %v505 = vpop.f32.mrb[0].mxu0
        %506 = vdwg.mxu0
        %v507 = vsel %vm460, %v502, -inf
        %508 = vmax.xlane.f32.xlu0 %v507
        %v509 = vpop.xlane.xlu0 %508
        %v510 = vsub.f32 %v502, %v509
        %v511 = vmul.f32 %v510, 1.442695
        %v512 = vpow.pop %v511
        %v513 = vsel %vm460, %v512, 0.0
        %514 = vadd.xlane.f32.xlu0 %v513
        %v515 = vpop.xlane.xlu0 %514
        %v516 = vrcp.pop %v515
        %v517 = vmul.f32 %v512, %v516
        %v518 = vpack.c.bf16 %v517, %v517
        %519 = vrot.lane.b32.xlu0 %v450, 64
        %v520 = vpop.permute.xlu0 %519
        %v522 = vsel %vm460, %v518, 0
        %vm524 = vcmask 1043456
        %v526 = vsel %vm524, %v520, 0
        %528 = vmatprep.subr.bf16.mxu0 0
        %529 = vmatpush1.bf16.msra.mxu0 %v526
        %530 = vmatprep.subr.bf16.mxu0 0
        %531 = vmatpush1.bf16.msra.mxu0 0
        %532 = vmatprep.subr.bf16.mxu0 0
        %533 = vmatpush1.bf16.msra.mxu0 0
        %534 = vmatprep.subr.bf16.mxu0 0
        %535 = vmatpush1.bf16.msra.mxu0 0
        %536 = vmatprep.subr.bf16.mxu0 0
        %537 = vmatpush1.bf16.msra.mxu0 0
        %538 = vmatprep.subr.bf16.mxu0 0
        %539 = vmatpush1.bf16.msra.mxu0 0
        %540 = vmatprep.subr.bf16.mxu0 0
        %541 = vmatpush1.bf16.msra.mxu0 0
        %542 = vmatprep.subr.bf16.mxu0 0
        %543 = vmatpush1.bf16.msra.mxu0 0
        %544 = vmatprep.subr.bf16.mxu0 0
        %545 = vmatpush1.bf16.msra.mxu0 0
        %546 = vmatprep.subr.bf16.mxu0 0
        %547 = vmatpush1.bf16.msra.mxu0 0
        %548 = vmatprep.subr.bf16.mxu0 0
        %549 = vmatpush1.bf16.msra.mxu0 0
        %550 = vmatprep.subr.bf16.mxu0 0
        %551 = vmatpush1.bf16.msra.mxu0 0
        %552 = vmatprep.subr.bf16.mxu0 0
        %553 = vmatpush1.bf16.msra.mxu0 0
        %554 = vmatprep.subr.bf16.mxu0 0
        %555 = vmatpush1.bf16.msra.mxu0 0
        %556 = vmatprep.subr.bf16.mxu0 0
        %557 = vmatpush1.bf16.msra.mxu0 0
        %558 = vmatprep.subr.bf16.mxu0 0
        %559 = vmatpush1.bf16.msra.mxu0 0
        %560 = vmatprep.mubr.bf16.mxu0 0
        %561 = vmatmul.mubr.bf16.gmra.mrb[0].mxu0 %v522
        %v562 = vpop.f32.mrb[0].mxu0
        %v563 = vadd.f32 0.0, %v562
        %v564 = vpop.f32.mrb[0].mxu0
        %v565 = vpop.f32.mrb[0].mxu0
        %v566 = vpop.f32.mrb[0].mxu0
        %567 = vdwg.mxu0
        %568 = vrot.lane.b32.xlu0 %v450, 120
        %v569 = vpop.permute.xlu0 %568
        %570 = vrot.lane.b32.xlu0 %v450, 88
        %v571 = vpop.permute.xlu0 %570
        %v573 = vsel %vm460, %v569, 0
        %v576 = vsel %vm460, %v571, 0
        %578 = vmatprep.subr.bf16.mxu0 0
        %579 = vmatpush1.bf16.xpose.msra.mxu0 %v576
        %580 = vmatprep.subr.bf16.mxu0 0
        %581 = vmatpush1.bf16.xpose.msra.mxu0 0
        %582 = vmatprep.subr.bf16.mxu0 0
        %583 = vmatpush1.bf16.xpose.msra.mxu0 0
        %584 = vmatprep.subr.bf16.mxu0 0
        %585 = vmatpush1.bf16.xpose.msra.mxu0 0
        %586 = vmatprep.subr.bf16.mxu0 0
        %587 = vmatpush1.bf16.xpose.msra.mxu0 0
        %588 = vmatprep.subr.bf16.mxu0 0
        %589 = vmatpush1.bf16.xpose.msra.mxu0 0
        %590 = vmatprep.subr.bf16.mxu0 0
        %591 = vmatpush1.bf16.xpose.msra.mxu0 0
        %592 = vmatprep.subr.bf16.mxu0 0
        %593 = vmatpush1.bf16.xpose.msra.mxu0 0
        %594 = vmatprep.subr.bf16.mxu0 0
        %595 = vmatpush1.bf16.xpose.msra.mxu0 0
        %596 = vmatprep.subr.bf16.mxu0 0
        %597 = vmatpush1.bf16.xpose.msra.mxu0 0
        %598 = vmatprep.subr.bf16.mxu0 0
        %599 = vmatpush1.bf16.xpose.msra.mxu0 0
        %600 = vmatprep.subr.bf16.mxu0 0
        %601 = vmatpush1.bf16.xpose.msra.mxu0 0
        %602 = vmatprep.subr.bf16.mxu0 0
        %603 = vmatpush1.bf16.xpose.msra.mxu0 0
        %604 = vmatprep.subr.bf16.mxu0 0
        %605 = vmatpush1.bf16.xpose.msra.mxu0 0
        %606 = vmatprep.subr.bf16.mxu0 0
        %607 = vmatpush1.bf16.xpose.msra.mxu0 0
        %608 = vmatprep.subr.bf16.mxu0 0
        %609 = vmatpush1.bf16.xpose.msra.mxu0 0
        %610 = vmatprep.mubr.bf16.mxu0 0
        %611 = vmatmul.mubr.bf16.gmra.mrb[0].mxu0 %v573
        %v612 = vpop.f32.mrb[0].mxu0
        %v613 = vadd.f32 %v455, %v612
        %v614 = vpop.f32.mrb[0].mxu0
        %v615 = vpop.f32.mrb[0].mxu0
        %v616 = vpop.f32.mrb[0].mxu0
        %617 = vdwg.mxu0
        %v618 = vsel %vm460, %v613, -inf
        %619 = vmax.xlane.f32.xlu0 %v618
        %v620 = vpop.xlane.xlu0 %619
        %v621 = vsub.f32 %v613, %v620
        %v622 = vmul.f32 %v621, 1.442695
        %v623 = vpow.pop %v622
        %v624 = vsel %vm460, %v623, 0.0
        %625 = vadd.xlane.f32.xlu0 %v624
        %v626 = vpop.xlane.xlu0 %625
        %v627 = vrcp.pop %v626
        %v628 = vmul.f32 %v623, %v627
        %v629 = vpack.c.bf16 %v628, %v628
        %630 = vrot.lane.b32.xlu0 %v450, 56
        %v631 = vpop.permute.xlu0 %630
        %v633 = vsel %vm460, %v629, 0
        %v636 = vsel %vm524, %v631, 0
        %638 = vmatprep.subr.bf16.mxu0 0
        %639 = vmatpush1.bf16.msra.mxu0 %v636
        %640 = vmatprep.subr.bf16.mxu0 0
        %641 = vmatpush1.bf16.msra.mxu0 0
        %642 = vmatprep.subr.bf16.mxu0 0
        %643 = vmatpush1.bf16.msra.mxu0 0
        %644 = vmatprep.subr.bf16.mxu0 0
        %645 = vmatpush1.bf16.msra.mxu0 0
        %646 = vmatprep.subr.bf16.mxu0 0
        %647 = vmatpush1.bf16.msra.mxu0 0
        %648 = vmatprep.subr.bf16.mxu0 0
        %649 = vmatpush1.bf16.msra.mxu0 0
        %650 = vmatprep.subr.bf16.mxu0 0
        %651 = vmatpush1.bf16.msra.mxu0 0
        %652 = vmatprep.subr.bf16.mxu0 0
        %653 = vmatpush1.bf16.msra.mxu0 0
        %654 = vmatprep.subr.bf16.mxu0 0
        %655 = vmatpush1.bf16.msra.mxu0 0
        %656 = vmatprep.subr.bf16.mxu0 0
        %657 = vmatpush1.bf16.msra.mxu0 0
        %658 = vmatprep.subr.bf16.mxu0 0
        %659 = vmatpush1.bf16.msra.mxu0 0
        %660 = vmatprep.subr.bf16.mxu0 0
        %661 = vmatpush1.bf16.msra.mxu0 0
        %662 = vmatprep.subr.bf16.mxu0 0
        %663 = vmatpush1.bf16.msra.mxu0 0
        %664 = vmatprep.subr.bf16.mxu0 0
        %665 = vmatpush1.bf16.msra.mxu0 0
        %666 = vmatprep.subr.bf16.mxu0 0
        %667 = vmatpush1.bf16.msra.mxu0 0
        %668 = vmatprep.subr.bf16.mxu0 0
        %669 = vmatpush1.bf16.msra.mxu0 0
        %670 = vmatprep.mubr.bf16.mxu0 0
        %671 = vmatmul.mubr.bf16.gmra.mrb[0].mxu0 %v633
        %v672 = vpop.f32.mrb[0].mxu0
        %v673 = vadd.f32 0.0, %v672
        %v674 = vpop.f32.mrb[0].mxu0
        %v675 = vpop.f32.mrb[0].mxu0
        %v676 = vpop.f32.mrb[0].mxu0
        %677 = vdwg.mxu0
        %678 = vrot.lane.b32.xlu0 %v450, 112
        %v679 = vpop.permute.xlu0 %678
        %680 = vrot.lane.b32.xlu0 %v450, 80
        %v681 = vpop.permute.xlu0 %680
        %v683 = vsel %vm460, %v679, 0
        %v686 = vsel %vm460, %v681, 0
        %688 = vmatprep.subr.bf16.mxu0 0
        %689 = vmatpush1.bf16.xpose.msra.mxu0 %v686
        %690 = vmatprep.subr.bf16.mxu0 0
        %691 = vmatpush1.bf16.xpose.msra.mxu0 0
        %692 = vmatprep.subr.bf16.mxu0 0
        %693 = vmatpush1.bf16.xpose.msra.mxu0 0
        %694 = vmatprep.subr.bf16.mxu0 0
        %695 = vmatpush1.bf16.xpose.msra.mxu0 0
        %696 = vmatprep.subr.bf16.mxu0 0
        %697 = vmatpush1.bf16.xpose.msra.mxu0 0
        %698 = vmatprep.subr.bf16.mxu0 0
        %699 = vmatpush1.bf16.xpose.msra.mxu0 0
        %700 = vmatprep.subr.bf16.mxu0 0
        %701 = vmatpush1.bf16.xpose.msra.mxu0 0
        %702 = vmatprep.subr.bf16.mxu0 0
        %703 = vmatpush1.bf16.xpose.msra.mxu0 0
        %704 = vmatprep.subr.bf16.mxu0 0
        %705 = vmatpush1.bf16.xpose.msra.mxu0 0
        %706 = vmatprep.subr.bf16.mxu0 0
        %707 = vmatpush1.bf16.xpose.msra.mxu0 0
        %708 = vmatprep.subr.bf16.mxu0 0
        %709 = vmatpush1.bf16.xpose.msra.mxu0 0
        %710 = vmatprep.subr.bf16.mxu0 0
        %711 = vmatpush1.bf16.xpose.msra.mxu0 0
        %712 = vmatprep.subr.bf16.mxu0 0
        %713 = vmatpush1.bf16.xpose.msra.mxu0 0
        %714 = vmatprep.subr.bf16.mxu0 0
        %715 = vmatpush1.bf16.xpose.msra.mxu0 0
        %716 = vmatprep.subr.bf16.mxu0 0
        %717 = vmatpush1.bf16.xpose.msra.mxu0 0
        %718 = vmatprep.subr.bf16.mxu0 0
        %719 = vmatpush1.bf16.xpose.msra.mxu0 0
        %720 = vmatprep.mubr.bf16.mxu0 0
        %721 = vmatmul.mubr.bf16.gmra.mrb[0].mxu0 %v683
        %v722 = vpop.f32.mrb[0].mxu0
        %v723 = vadd.f32 %v455, %v722
        %v724 = vpop.f32.mrb[0].mxu0
        %v725 = vpop.f32.mrb[0].mxu0
        %v726 = vpop.f32.mrb[0].mxu0
        %727 = vdwg.mxu0
        %v728 = vsel %vm460, %v723, -inf
        %729 = vmax.xlane.f32.xlu0 %v728
        %v730 = vpop.xlane.xlu0 %729
        %v731 = vsub.f32 %v723, %v730
        %v732 = vmul.f32 %v731, 1.442695
        %v733 = vpow.pop %v732
        %v734 = vsel %vm460, %v733, 0.0
        %735 = vadd.xlane.f32.xlu0 %v734
        %v736 = vpop.xlane.xlu0 %735
        %v737 = vrcp.pop %v736
        %v738 = vmul.f32 %v733, %v737
        %v739 = vpack.c.bf16 %v738, %v738
        %740 = vrot.lane.b32.xlu0 %v450, 48
        %v741 = vpop.permute.xlu0 %740
        %v743 = vsel %vm460, %v739, 0
        %v746 = vsel %vm524, %v741, 0
        %748 = vmatprep.subr.bf16.mxu0 0
        %749 = vmatpush1.bf16.msra.mxu0 %v746
        %750 = vmatprep.subr.bf16.mxu0 0
        %751 = vmatpush1.bf16.msra.mxu0 0
        %752 = vmatprep.subr.bf16.mxu0 0
        %753 = vmatpush1.bf16.msra.mxu0 0
        %754 = vmatprep.subr.bf16.mxu0 0
        %755 = vmatpush1.bf16.msra.mxu0 0
        %756 = vmatprep.subr.bf16.mxu0 0
        %757 = vmatpush1.bf16.msra.mxu0 0
        %758 = vmatprep.subr.bf16.mxu0 0
        %759 = vmatpush1.bf16.msra.mxu0 0
        %760 = vmatprep.subr.bf16.mxu0 0
        %761 = vmatpush1.bf16.msra.mxu0 0
        %762 = vmatprep.subr.bf16.mxu0 0
        %763 = vmatpush1.bf16.msra.mxu0 0
        %764 = vmatprep.subr.bf16.mxu0 0
        %765 = vmatpush1.bf16.msra.mxu0 0
        %766 = vmatprep.subr.bf16.mxu0 0
        %767 = vmatpush1.bf16.msra.mxu0 0
        %768 = vmatprep.subr.bf16.mxu0 0
        %769 = vmatpush1.bf16.msra.mxu0 0
        %770 = vmatprep.subr.bf16.mxu0 0
        %771 = vmatpush1.bf16.msra.mxu0 0
        %772 = vmatprep.subr.bf16.mxu0 0
        %773 = vmatpush1.bf16.msra.mxu0 0
        %774 = vmatprep.subr.bf16.mxu0 0
        %775 = vmatpush1.bf16.msra.mxu0 0
        %776 = vmatprep.subr.bf16.mxu0 0
        %777 = vmatpush1.bf16.msra.mxu0 0
        %778 = vmatprep.subr.bf16.mxu0 0
        %779 = vmatpush1.bf16.msra.mxu0 0
        %780 = vmatprep.mubr.bf16.mxu0 0
        %781 = vmatmul.mubr.bf16.gmra.mrb[0].mxu0 %v743
        %v782 = vpop.f32.mrb[0].mxu0
        %v783 = vadd.f32 0.0, %v782
        %v784 = vpop.f32.mrb[0].mxu0
        %v785 = vpop.f32.mrb[0].mxu0
        %v786 = vpop.f32.mrb[0].mxu0
        %787 = vdwg.mxu0
        %788 = vrot.lane.b32.xlu0 %v450, 104
        %v789 = vpop.permute.xlu0 %788
        %790 = vrot.lane.b32.xlu0 %v450, 72
        %v791 = vpop.permute.xlu0 %790
        %v793 = vsel %vm460, %v789, 0
        %v796 = vsel %vm460, %v791, 0
        %798 = vmatprep.subr.bf16.mxu0 0
        %799 = vmatpush1.bf16.xpose.msra.mxu0 %v796
        %800 = vmatprep.subr.bf16.mxu0 0
        %801 = vmatpush1.bf16.xpose.msra.mxu0 0
        %802 = vmatprep.subr.bf16.mxu0 0
        %803 = vmatpush1.bf16.xpose.msra.mxu0 0
        %804 = vmatprep.subr.bf16.mxu0 0
        %805 = vmatpush1.bf16.xpose.msra.mxu0 0
        %806 = vmatprep.subr.bf16.mxu0 0
        %807 = vmatpush1.bf16.xpose.msra.mxu0 0
        %808 = vmatprep.subr.bf16.mxu0 0
        %809 = vmatpush1.bf16.xpose.msra.mxu0 0
        %810 = vmatprep.subr.bf16.mxu0 0
        %811 = vmatpush1.bf16.xpose.msra.mxu0 0
        %812 = vmatprep.subr.bf16.mxu0 0
        %813 = vmatpush1.bf16.xpose.msra.mxu0 0
        %814 = vmatprep.subr.bf16.mxu0 0
        %815 = vmatpush1.bf16.xpose.msra.mxu0 0
        %816 = vmatprep.subr.bf16.mxu0 0
        %817 = vmatpush1.bf16.xpose.msra.mxu0 0
        %818 = vmatprep.subr.bf16.mxu0 0
        %819 = vmatpush1.bf16.xpose.msra.mxu0 0
        %820 = vmatprep.subr.bf16.mxu0 0
        %821 = vmatpush1.bf16.xpose.msra.mxu0 0
        %822 = vmatprep.subr.bf16.mxu0 0
        %823 = vmatpush1.bf16.xpose.msra.mxu0 0
        %824 = vmatprep.subr.bf16.mxu0 0
        %825 = vmatpush1.bf16.xpose.msra.mxu0 0
        %826 = vmatprep.subr.bf16.mxu0 0
        %827 = vmatpush1.bf16.xpose.msra.mxu0 0
        %828 = vmatprep.subr.bf16.mxu0 0
        %829 = vmatpush1.bf16.xpose.msra.mxu0 0
        %830 = vmatprep.mubr.bf16.mxu0 0
        %831 = vmatmul.mubr.bf16.gmra.mrb[0].mxu0 %v793
        %v832 = vpop.f32.mrb[0].mxu0
        %v833 = vadd.f32 %v455, %v832
        %v834 = vpop.f32.mrb[0].mxu0
        %v835 = vpop.f32.mrb[0].mxu0
        %v836 = vpop.f32.mrb[0].mxu0
        %837 = vdwg.mxu0
        %v838 = vsel %vm460, %v833, -inf
        %839 = vmax.xlane.f32.xlu0 %v838
        %v840 = vpop.xlane.xlu0 %839
        %v841 = vsub.f32 %v833, %v840
        %v842 = vmul.f32 %v841, 1.442695
        %v843 = vpow.pop %v842
        %v844 = vsel %vm460, %v843, 0.0
        %845 = vadd.xlane.f32.xlu0 %v844
        %v846 = vpop.xlane.xlu0 %845
        %v847 = vrcp.pop %v846
        %v848 = vmul.f32 %v843, %v847
        %v849 = vpack.c.bf16 %v848, %v848
        %850 = vrot.lane.b32.xlu0 %v450, 40
        %v851 = vpop.permute.xlu0 %850
        %v853 = vsel %vm460, %v849, 0
        %v856 = vsel %vm524, %v851, 0
        %858 = vmatprep.subr.bf16.mxu0 0
        %859 = vmatpush1.bf16.msra.mxu0 %v856
        %860 = vmatprep.subr.bf16.mxu0 0
        %861 = vmatpush1.bf16.msra.mxu0 0
        %862 = vmatprep.subr.bf16.mxu0 0
        %863 = vmatpush1.bf16.msra.mxu0 0
        %864 = vmatprep.subr.bf16.mxu0 0
        %865 = vmatpush1.bf16.msra.mxu0 0
        %866 = vmatprep.subr.bf16.mxu0 0
        %867 = vmatpush1.bf16.msra.mxu0 0
        %868 = vmatprep.subr.bf16.mxu0 0
        %869 = vmatpush1.bf16.msra.mxu0 0
        %870 = vmatprep.subr.bf16.mxu0 0
        %871 = vmatpush1.bf16.msra.mxu0 0
        %872 = vmatprep.subr.bf16.mxu0 0
        %873 = vmatpush1.bf16.msra.mxu0 0
        %874 = vmatprep.subr.bf16.mxu0 0
        %875 = vmatpush1.bf16.msra.mxu0 0
        %876 = vmatprep.subr.bf16.mxu0 0
        %877 = vmatpush1.bf16.msra.mxu0 0
        %878 = vmatprep.subr.bf16.mxu0 0
        %879 = vmatpush1.bf16.msra.mxu0 0
        %880 = vmatprep.subr.bf16.mxu0 0
        %881 = vmatpush1.bf16.msra.mxu0 0
        %882 = vmatprep.subr.bf16.mxu0 0
        %883 = vmatpush1.bf16.msra.mxu0 0
        %884 = vmatprep.subr.bf16.mxu0 0
        %885 = vmatpush1.bf16.msra.mxu0 0
        %886 = vmatprep.subr.bf16.mxu0 0
        %887 = vmatpush1.bf16.msra.mxu0 0
        %888 = vmatprep.subr.bf16.mxu0 0
        %889 = vmatpush1.bf16.msra.mxu0 0
        %890 = vmatprep.mubr.bf16.mxu0 0
        %891 = vmatmul.mubr.bf16.gmra.mrb[0].mxu0 %v853
        %v892 = vpop.f32.mrb[0].mxu0
        %v893 = vadd.f32 0.0, %v892
        %v894 = vpop.f32.mrb[0].mxu0
        %v895 = vpop.f32.mrb[0].mxu0
        %v896 = vpop.f32.mrb[0].mxu0
        %897 = vdwg.mxu0
        %899 = vrot.lane.b32.xlu0 %v673, 8
        %v900 = vpop.permute.xlu0 %899
        %903 = vrot.lane.b32.xlu0 %v783, 16
        %v904 = vpop.permute.xlu0 %903
        %907 = vrot.lane.b32.xlu0 %v893, 24
        %v908 = vpop.permute.xlu0 %907
        %v910 = vsel %vm460, %v563, %v900
        %vm911 = vcmask 130048
        %v912 = vsel %vm911, %v910, %v904
        %vm913 = vcmask 195584
        %v914 = vsel %vm913, %v912, %v908
        %v915 = vpack.c.bf16 %v914, %v914
        %s916 = smul.addr %s384, 4
        %s917 = scalar_lea.vmem %s5, %s916
        %v918 = vld [vmem:[%s917] sm:$0xf]
        %v919 = vld [vmem:[%s917 + $0x4] sm:$0xf]
        %v920 = vld [vmem:[%s917 + $0x8] sm:$0xf]
        %v921 = vld [vmem:[%s917 + $0xc] sm:$0xf]
        %v922 = vlaneseq
        %v923 = vshrl.u32 %v922, 7
        %v924 = vsub.s32 1, %v923
        %v925 = vrot.slane %v382, %v924
        %v930 = vunpack.c.l.b16 %v918
        %v931 = vunpack.c.l.b16 %v919
        %v932 = vunpack.c.l.b16 %v920
        %v933 = vunpack.c.l.b16 %v921
        %v934 = vpack.c.b16 %v931, %v930
        %v935 = vpack.c.b16 %v933, %v932
        %v939 = vsel %vm345, %v915, 0
        %941 = vmatprep.subr.bf16.mxu0 0
        %942 = vmatpush1.bf16.msra.mxu0 %v934
        %943 = vmatprep.subr.bf16.mxu0 0
        %944 = vmatpush1.bf16.msra.mxu0 %v935
        %945 = vmatprep.subr.bf16.mxu0 0
        %946 = vmatpush1.bf16.msra.mxu0 0
        %947 = vmatprep.subr.bf16.mxu0 0
        %948 = vmatpush1.bf16.msra.mxu0 0
        %949 = vmatprep.subr.bf16.mxu0 0
        %950 = vmatpush1.bf16.msra.mxu0 0
        %951 = vmatprep.subr.bf16.mxu0 0
        %952 = vmatpush1.bf16.msra.mxu0 0
        %953 = vmatprep.subr.bf16.mxu0 0
        %954 = vmatpush1.bf16.msra.mxu0 0
        %955 = vmatprep.subr.bf16.mxu0 0
        %956 = vmatpush1.bf16.msra.mxu0 0
        %957 = vmatprep.subr.bf16.mxu0 0
        %958 = vmatpush1.bf16.msra.mxu0 0
        %959 = vmatprep.subr.bf16.mxu0 0
        %960 = vmatpush1.bf16.msra.mxu0 0
        %961 = vmatprep.subr.bf16.mxu0 0
        %962 = vmatpush1.bf16.msra.mxu0 0
        %963 = vmatprep.subr.bf16.mxu0 0
        %964 = vmatpush1.bf16.msra.mxu0 0
        %965 = vmatprep.subr.bf16.mxu0 0
        %966 = vmatpush1.bf16.msra.mxu0 0
        %967 = vmatprep.subr.bf16.mxu0 0
        %968 = vmatpush1.bf16.msra.mxu0 0
        %969 = vmatprep.subr.bf16.mxu0 0
        %970 = vmatpush1.bf16.msra.mxu0 0
        %971 = vmatprep.subr.bf16.mxu0 0
        %972 = vmatpush1.bf16.msra.mxu0 0
        %973 = vmatprep.mubr.bf16.mxu0 0
        %974 = vmatmul.mubr.bf16.gmra.mrb[0].mxu0 %v939
        %v975 = vpop.f32.mrb[0].mxu0
        %v976 = vadd.f32 %v925, %v975
        %v977 = vpop.f32.mrb[0].mxu0
        %v978 = vpop.f32.mrb[0].mxu0
        %v979 = vpop.f32.mrb[0].mxu0
        %980 = vdwg.mxu0
        %v981 = vadd.f32 %v379, %v976
        %v982 = vsel %vm345, %v981, 0.0
        %983 = vadd.xlane.f32.xlu0 %v982
        %v984 = vpop.xlane.xlu0 %983
        %v985 = vmul.f32 %v984, %v349
        %v986 = vsub.f32 %v981, %v985
        %v987 = vmul.f32 %v986, %v986
        %v988 = vsel %vm345, %v987, 0.0
        %989 = vadd.xlane.f32.xlu0 %v988
        %v990 = vpop.xlane.xlu0 %989
        %v991 = vmul.f32 %v990, %v349
        %v992 = vadd.f32 %v991, 1e-12
        %v993 = vrsqrt.pop %v992
        %v994 = vmul.f32 %v986, %v993
        %v995 = vlaneseq
        %v996 = vshrl.u32 %v995, 7
        %v997 = vsub.s32 2, %v996
        %v998 = vrot.slane %v382, %v997
        %v999 = vmul.f32 %v994, %v998
        %v1000 = vlaneseq
        %v1001 = vshrl.u32 %v1000, 7
        %v1002 = vsub.s32 3, %v1001
        %v1003 = vrot.slane %v382, %v1002
        %v1004 = vadd.f32 %v999, %v1003
        %v1005 = vpack.c.bf16 %v1004, %v1004
        %s1006 = smul.addr %s384, 4
        %s1007 = scalar_lea.vmem %s6, %s1006
        %v1008 = vld [vmem:[%s1007] sm:$0xf]
        %v1009 = vld [vmem:[%s1007 + $0x4] sm:$0xf]
        %v1010 = vld [vmem:[%s1007 + $0x8] sm:$0xf]
        %v1011 = vld [vmem:[%s1007 + $0xc] sm:$0xf]
        %v1012 = vlaneseq
        %v1013 = vshrl.u32 %v1012, 7
        %v1014 = vsub.s32 4, %v1013
        %v1015 = vrot.slane %v382, %v1014
        %v1020 = vunpack.c.l.b16 %v1008
        %v1021 = vunpack.c.l.b16 %v1009
        %v1022 = vunpack.c.l.b16 %v1010
        %v1023 = vunpack.c.l.b16 %v1011
        %v1024 = vpack.c.b16 %v1021, %v1020
        %v1025 = vpack.c.b16 %v1023, %v1022
        %v1029 = vsel %vm345, %v1005, 0
        %1031 = vmatprep.subr.bf16.mxu0 0
        %1032 = vmatpush1.bf16.msra.mxu0 %v1024
        %1033 = vmatprep.subr.bf16.mxu0 0
        %1034 = vmatpush1.bf16.msra.mxu0 %v1025
        %1035 = vmatprep.subr.bf16.mxu0 0
        %1036 = vmatpush1.bf16.msra.mxu0 0
        %1037 = vmatprep.subr.bf16.mxu0 0
        %1038 = vmatpush1.bf16.msra.mxu0 0
        %1039 = vmatprep.subr.bf16.mxu0 0
        %1040 = vmatpush1.bf16.msra.mxu0 0
        %1041 = vmatprep.subr.bf16.mxu0 0
        %1042 = vmatpush1.bf16.msra.mxu0 0
        %1043 = vmatprep.subr.bf16.mxu0 0
        %1044 = vmatpush1.bf16.msra.mxu0 0
        %1045 = vmatprep.subr.bf16.mxu0 0
        %1046 = vmatpush1.bf16.msra.mxu0 0
        %1047 = vmatprep.subr.bf16.mxu0 0
        %1048 = vmatpush1.bf16.msra.mxu0 0
        %1049 = vmatprep.subr.bf16.mxu0 0
        %1050 = vmatpush1.bf16.msra.mxu0 0
        %1051 = vmatprep.subr.bf16.mxu0 0
        %1052 = vmatpush1.bf16.msra.mxu0 0
        %1053 = vmatprep.subr.bf16.mxu0 0
        %1054 = vmatpush1.bf16.msra.mxu0 0
        %1055 = vmatprep.subr.bf16.mxu0 0
        %1056 = vmatpush1.bf16.msra.mxu0 0
        %1057 = vmatprep.subr.bf16.mxu0 0
        %1058 = vmatpush1.bf16.msra.mxu0 0
        %1059 = vmatprep.subr.bf16.mxu0 0
        %1060 = vmatpush1.bf16.msra.mxu0 0
        %1061 = vmatprep.subr.bf16.mxu0 0
        %1062 = vmatpush1.bf16.msra.mxu0 0
        %1063 = vmatprep.mubr.bf16.mxu0 0
        %1064 = vmatmul.mubr.bf16.gmra.mrb[0].mxu0 %v1029
        %v1065 = vpop.f32.mrb[0].mxu0
        %v1066 = vadd.f32 %v1015, %v1065
        %v1067 = vpop.f32.mrb[0].mxu0
        %v1068 = vpop.f32.mrb[0].mxu0
        %v1069 = vpop.f32.mrb[0].mxu0
        %1070 = vdwg.mxu0
        %v1071 = vmul.f32 %v1066, %v1066
        %v1072 = vmul.f32 %v1066, %v1071
        %v1073 = vmul.f32 %v1072, 0.044715
        %v1074 = vadd.f32 %v1066, %v1073
        %v1075 = vmul.f32 %v1074, 0.7978846
        %v1076 = vtanh.pop %v1075
        %v1077 = vadd.f32 %v1076, 1.0
        %v1078 = vmul.f32 %v1077, 0.5
        %v1079 = vmul.f32 %v1066, %v1078
        %v1080 = vpack.c.bf16 %v1079, %v1079
        %s1081 = smul.addr %s380, 4
        %s1082 = scalar_lea.vmem %s7, %s1081
        %v1083 = vld [vmem:[%s1082] sm:$0xf]
        %v1084 = vld [vmem:[%s1082 + $0x4] sm:$0xf]
        %v1085 = vld [vmem:[%s1082 + $0x8] sm:$0xf]
        %v1086 = vld [vmem:[%s1082 + $0xc] sm:$0xf]
        %v1087 = vld [vmem:[%s1082 + $0x10] sm:$0xf]
        %v1088 = vld [vmem:[%s1082 + $0x14] sm:$0xf]
        %v1089 = vld [vmem:[%s1082 + $0x18] sm:$0xf]
        %v1090 = vld [vmem:[%s1082 + $0x1c] sm:$0xf]
        %v1091 = vlaneseq
        %v1092 = vshrl.u32 %v1091, 7
        %v1093 = vsub.s32 5, %v1092
        %v1094 = vrot.slane %v382, %v1093
        %v1103 = vunpack.c.l.b16 %v1083
        %v1104 = vunpack.c.l.b16 %v1084
        %v1105 = vunpack.c.l.b16 %v1085
        %v1106 = vunpack.c.l.b16 %v1086
        %v1107 = vunpack.c.l.b16 %v1087
        %v1108 = vunpack.c.l.b16 %v1088
        %v1109 = vunpack.c.l.b16 %v1089
        %v1110 = vunpack.c.l.b16 %v1090
        %v1111 = vpack.c.b16 %v1104, %v1103
        %v1112 = vpack.c.b16 %v1106, %v1105
        %v1113 = vpack.c.b16 %v1108, %v1107
        %v1114 = vpack.c.b16 %v1110, %v1109
        %vm1119 = vcmask 523264
        %v1121 = vsel %vm1119, %v1080, 0
        %1123 = vmatprep.subr.bf16.mxu0 0
        %1124 = vmatpush1.bf16.msra.mxu0 %v1111
        %1125 = vmatprep.subr.bf16.mxu0 0
        %1126 = vmatpush1.bf16.msra.mxu0 %v1112
        %1127 = vmatprep.subr.bf16.mxu0 0
        %1128 = vmatpush1.bf16.msra.mxu0 %v1113
        %1129 = vmatprep.subr.bf16.mxu0 0
        %1130 = vmatpush1.bf16.msra.mxu0 %v1114
        %1131 = vmatprep.subr.bf16.mxu0 0
        %1132 = vmatpush1.bf16.msra.mxu0 0
        %1133 = vmatprep.subr.bf16.mxu0 0
        %1134 = vmatpush1.bf16.msra.mxu0 0
        %1135 = vmatprep.subr.bf16.mxu0 0
        %1136 = vmatpush1.bf16.msra.mxu0 0
        %1137 = vmatprep.subr.bf16.mxu0 0
        %1138 = vmatpush1.bf16.msra.mxu0 0
        %1139 = vmatprep.subr.bf16.mxu0 0
        %1140 = vmatpush1.bf16.msra.mxu0 0
        %1141 = vmatprep.subr.bf16.mxu0 0
        %1142 = vmatpush1.bf16.msra.mxu0 0
        %1143 = vmatprep.subr.bf16.mxu0 0
        %1144 = vmatpush1.bf16.msra.mxu0 0
        %1145 = vmatprep.subr.bf16.mxu0 0
        %1146 = vmatpush1.bf16.msra.mxu0 0
        %1147 = vmatprep.subr.bf16.mxu0 0
        %1148 = vmatpush1.bf16.msra.mxu0 0
        %1149 = vmatprep.subr.bf16.mxu0 0
        %1150 = vmatpush1.bf16.msra.mxu0 0
        %1151 = vmatprep.subr.bf16.mxu0 0
        %1152 = vmatpush1.bf16.msra.mxu0 0
        %1153 = vmatprep.subr.bf16.mxu0 0
        %1154 = vmatpush1.bf16.msra.mxu0 0
        %1155 = vmatprep.mubr.bf16.mxu0 0
        %1156 = vmatmul.mubr.bf16.gmra.mrb[0].mxu0 %v1121
        %v1157 = vpop.f32.mrb[0].mxu0
        %v1158 = vadd.f32 %v1094, %v1157
        %v1159 = vpop.f32.mrb[0].mxu0
        %v1160 = vpop.f32.mrb[0].mxu0
        %v1161 = vpop.f32.mrb[0].mxu0
        %1162 = vdwg.mxu0
        %v1163 = vadd.f32 %v1004, %v1158
        %v1164 = vsel %vm345, %v1163, 0.0
        %1165 = vadd.xlane.f32.xlu0 %v1164
        %v1166 = vpop.xlane.xlu0 %1165
        %v1167 = vmul.f32 %v1166, %v349
        %v1168 = vsub.f32 %v1163, %v1167
        %v1169 = vmul.f32 %v1168, %v1168
        %v1170 = vsel %vm345, %v1169, 0.0
        %1171 = vadd.xlane.f32.xlu0 %v1170
        %v1172 = vpop.xlane.xlu0 %1171
        %v1173 = vmul.f32 %v1172, %v349
        %v1174 = vadd.f32 %v1173, 1e-12
        %v1175 = vrsqrt.pop %v1174
        %v1176 = vmul.f32 %v1168, %v1175
        %v1177 = vlaneseq
        %v1178 = vshrl.u32 %v1177, 7
        %v1179 = vsub.s32 6, %v1178
        %v1180 = vrot.slane %v382, %v1179
        %v1181 = vmul.f32 %v1176, %v1180
        %v1182 = vlaneseq
        %v1183 = vshrl.u32 %v1182, 7
        %v1184 = vsub.s32 7, %v1183
        %v1185 = vrot.slane %v382, %v1184
        %v1186 = vadd.f32 %v1181, %v1185
      $region61: #{sentence_transformer_with_projection.1} parent=55 // loop_footer
        %s378 = sadd.s32 1, %s374
      $region62: #{sentence_transformer_with_projection.1} parent=55 // loop_footer_branch
        %373 = sbr.rel target = $region58
      $region63: #{sentence_transformer_with_projection.1} parent=55 // loop_exit
        _
      %v1187 = vpack.c.bf16 %v379, %v379
      %v1188 = vld [vmem:[%s8] sm:$0xf]
      %v1189 = vld [vmem:[%s8 + $0x4] sm:$0xf]
      %v1190 = vld [vmem:[%s8 + $0x8] sm:$0xf]
      %v1191 = vld [vmem:[%s8 + $0xc] sm:$0xf]
      %v1192 = vlaneseq
      %v1193 = vshrl.u32 %v1192, 7
      %v1194 = vsub.s32 2, %v1193
      %v1195 = vrot.slane %v343, %v1194
      %v1200 = vunpack.c.l.b16 %v1188
      %v1201 = vunpack.c.l.b16 %v1189
      %v1202 = vunpack.c.l.b16 %v1190
      %v1203 = vunpack.c.l.b16 %v1191
      %v1204 = vpack.c.b16 %v1201, %v1200
      %v1205 = vpack.c.b16 %v1203, %v1202
      %v1209 = vsel %vm345, %v1187, 0
      %1211 = vmatprep.subr.bf16.mxu0 0
      %1212 = vmatpush1.bf16.msra.mxu0 %v1204
      %1213 = vmatprep.subr.bf16.mxu0 0
      %1214 = vmatpush1.bf16.msra.mxu0 %v1205
      %1215 = vmatprep.subr.bf16.mxu0 0
      %1216 = vmatpush1.bf16.msra.mxu0 0
      %1217 = vmatprep.subr.bf16.mxu0 0
      %1218 = vmatpush1.bf16.msra.mxu0 0
      %1219 = vmatprep.subr.bf16.mxu0 0
      %1220 = vmatpush1.bf16.msra.mxu0 0
      %1221 = vmatprep.subr.bf16.mxu0 0
      %1222 = vmatpush1.bf16.msra.mxu0 0
      %1223 = vmatprep.subr.bf16.mxu0 0
      %1224 = vmatpush1.bf16.msra.mxu0 0
      %1225 = vmatprep.subr.bf16.mxu0 0
      %1226 = vmatpush1.bf16.msra.mxu0 0
      %1227 = vmatprep.subr.bf16.mxu0 0
      %1228 = vmatpush1.bf16.msra.mxu0 0
      %1229 = vmatprep.subr.bf16.mxu0 0
      %1230 = vmatpush1.bf16.msra.mxu0 0
      %1231 = vmatprep.subr.bf16.mxu0 0
      %1232 = vmatpush1.bf16.msra.mxu0 0
      %1233 = vmatprep.subr.bf16.mxu0 0
      %1234 = vmatpush1.bf16.msra.mxu0 0
      %1235 = vmatprep.subr.bf16.mxu0 0
      %1236 = vmatpush1.bf16.msra.mxu0 0
      %1237 = vmatprep.subr.bf16.mxu0 0
      %1238 = vmatpush1.bf16.msra.mxu0 0
      %1239 = vmatprep.subr.bf16.mxu0 0
      %1240 = vmatpush1.bf16.msra.mxu0 0
      %1241 = vmatprep.subr.bf16.mxu0 0
      %1242 = vmatpush1.bf16.msra.mxu0 0
      %1243 = vmatprep.mubr.bf16.mxu0 0
      %1244 = vmatmul.mubr.bf16.gmra.mrb[0].mxu0 %v1209
      %v1245 = vpop.f32.mrb[0].mxu0
      %v1246 = vadd.f32 %v1195, %v1245
      %v1247 = vpop.f32.mrb[0].mxu0
      %v1248 = vpop.f32.mrb[0].mxu0
      %v1249 = vpop.f32.mrb[0].mxu0
      %1250 = vdwg.mxu0
      %1251 = vst [vmem:[%s341] sm:$0xff] %v1246
      %p1252 = scmp.lt.s32.totalorder %s20, 1
      %s1253 = scalar_select %p1252, %s20, 1
      %s1254 = smul.addr %s1253, 8
      %s1255 = scalar_lea.vmem %s9, %s1254
      // Predicated region
      $region64: #{sentence_transformer_with_projection.1} parent=55 // pred_check
        %p1256 = pneg %p237
      $region65: #{sentence_transformer_with_projection.1} parent=55 // pred_check_branch
        %1258 = sbr.rel (%p1256) target = $region67
      $region66: #{sentence_transformer_with_projection.1} parent=55 // pred_region
        _
      $region67: #{sentence_transformer_with_projection.1} parent=55 // pred_fallthru
        _
    $region56: #{sentence_transformer_with_projection.1} parent=5 // pred_fallthru
      _
    %p1259 = scmp.le.s32.totalorder 2, %s15
    // Predicated region
    $region68: #{sentence_transformer_with_projection.1} parent=5 // pred_check
      %p1260 = pneg %p1259
    $region69: #{sentence_transformer_with_projection.1} parent=5 // pred_check_branch
      %1262 = sbr.rel (%p1260) target = $region71
    $region70: #{sentence_transformer_with_projection.1} parent=5 // pred_region
      %s1263 = ssub.s32 %s15, 2
      // Predicated region
      $region72: #{sentence_transformer_with_projection.1} parent=70 // pred_check
        %p1264 = pneg %p243
      $region73: #{sentence_transformer_with_projection.1} parent=70 // pred_check_branch
        %1266 = sbr.rel (%p1264) target = $region75
      $region74: #{sentence_transformer_with_projection.1} parent=70 // pred_region
        %p1267 = scmp.lt.s32.totalorder %s21, 1
        %s1268 = scalar_select %p1267, %s21, 1
        %s1269 = smul.addr %s1268, 8
        %s1270 = scalar_lea.vmem %s9, %s1269
      $region75: #{sentence_transformer_with_projection.1} parent=70 // pred_fallthru
        _
    $region71: #{sentence_transformer_with_projection.1} parent=5 // pred_fallthru
      _
  $region6: #{sentence_transformer_with_projection.1} parent=0 // loop_footer
    %s19 = sadd.s32 1, %s15
  $region7: #{sentence_transformer_with_projection.1} parent=0 // loop_footer_branch
    %14 = sbr.rel target = $region3
  $region8: #{sentence_transformer_with_projection.1} parent=0 // loop_exit
    _

</llo_original>
